<compile_context>
chip_gen: v6e
topology: v6e:2x2x1
jax: 0.10.0
libtpu: 0.0.40
codegen_flags: <defaults>
</compile_context>

<pallas_src>
import jax
import jax.numpy as jnp
from jax.experimental import pallas as pl
from jax.experimental.pallas import tpu as pltpu


def _round_up(x, m):
    return ((x + m - 1) // m) * m


def _dualdis_att_pool_kernel(dis_ref, feat_ref, wfcf_ref, wfcd_ref, wmlp_ref,
                             shift_ref, out_ref, att_ref):
    # dis_ref : [1, K, 2,    Pt]   (channel 0 = g_dis, channel 1 = f_dis; lamda folded in weight)
    # feat_ref: [1, K, d_in, Pt]
    # wfcf_ref: [d_in, d_in]       (fc weight columns for the feature channels)
    # wfcd_ref: [d_in, 2]          (fc weight columns for [g, lamda*f])
    # wmlp_ref: [d_out, d_in]      (mlp weight with BN scale folded in)
    # shift_ref:[d_out, 1]         (folded BN shift)
    # out_ref : [1, d_out, Pt]
    # att_ref : VMEM scratch [K, d_in, Pt]
    K = feat_ref.shape[1]

    wfc_f = wfcf_ref[...].astype(jnp.float32)
    wfc_d = wfcd_ref[...].astype(jnp.float32)

    # Pass 1: attention logits per neighbor (1x1 conv as two lane-dense matmuls),
    # plus running max over K for a stable softmax.
    m = None
    for k in range(K):
        fk = feat_ref[0, k].astype(jnp.float32)            # [d_in, Pt]
        dk = dis_ref[0, k].astype(jnp.float32)              # [2,    Pt]
        a = (jnp.dot(wfc_f, fk, preferred_element_type=jnp.float32) +
             jnp.dot(wfc_d, dk, preferred_element_type=jnp.float32))
        att_ref[k] = a
        m = a if m is None else jnp.maximum(m, a)

    # Pass 2: softmax over K and attention-weighted sum over K.
    s = jnp.zeros_like(m)
    agg = jnp.zeros_like(m)
    for k in range(K):
        e = jnp.exp(att_ref[k] - m)
        s = s + e
        agg = agg + feat_ref[0, k].astype(jnp.float32) * e
    agg = agg * pl.reciprocal(s, approx=True)               # EUP vrcp

    # mlp 1x1 conv (BN scale folded into weight) + shift + ReLU.
    out = jnp.dot(wmlp_ref[...].astype(jnp.float32), agg,
                  preferred_element_type=jnp.float32)        # [d_out, Pt]
    out = jnp.maximum(out + shift_ref[...], 0.0)
    out_ref[0] = out.astype(out_ref.dtype)


def dualdis_att_pool(feature_set, f_dis, g_dis, params, *, lamda, point_tile=1024):
    """feature_set: [B, d_in, N, K]; f_dis, g_dis: [B, 1, N, K] (NCHW like PyTorch)."""
    B, d_in, N, K = feature_set.shape
    w_fc = params["w_fc"]          # [d_in, d_in + 2]  (out, in) from Conv2d weight
    w_mlp = params["w_mlp"]        # [d_out, d_in]
    gamma, beta = params["bn_gamma"], params["bn_beta"]
    mean, var, eps = params["bn_mean"], params["bn_var"], params["bn_eps"]
    d_out = w_mlp.shape[0]

    # Fold eval-mode BatchNorm into the mlp weight (scale) + a per-channel shift.
    scale = gamma / jnp.sqrt(var + eps)                      # [d_out]
    wmlp_s = w_mlp * scale[:, None]                          # [d_out, d_in]
    shift = (beta - mean * scale).reshape(d_out, 1)          # [d_out, 1]

    # Split the fc weight; concat order in PyTorch is [g_dis, f_dis, feature].
    # Fold lamda into the f_dis column so the kernel never scales f_dis.
    wfc_dis = jnp.stack([w_fc[:, 0], w_fc[:, 1] * lamda], axis=1)   # [d_in, 2]
    wfc_feat = w_fc[:, 2:]                                          # [d_in, d_in]

    # Layout plumbing: channels-on-sublane / points-on-lane tiles [B, K, C, N].
    feat_t = jnp.transpose(feature_set, (0, 3, 1, 2))                      # [B, K, d_in, N]
    dis_t = jnp.transpose(jnp.concatenate([g_dis, f_dis], axis=1),
                          (0, 3, 1, 2))                                    # [B, K, 2, N]

    # Lane-dense point tile (multiple of 128); pad ragged point counts with zeros
    # (padded columns produce a uniform softmax over zero features -> finite junk
    # that is sliced away below; no masking needed).
    Pt = min(point_tile, _round_up(N, 128))
    N_pad = _round_up(N, Pt)
    if N_pad != N:
        pad = [(0, 0), (0, 0), (0, 0), (0, N_pad - N)]
        feat_t = jnp.pad(feat_t, pad)
        dis_t = jnp.pad(dis_t, pad)

    grid = (B, N_pad // Pt)

    out = pl.pallas_call(
        _dualdis_att_pool_kernel,
        out_shape=jax.ShapeDtypeStruct((B, d_out, N_pad), feature_set.dtype),
        grid_spec=pltpu.PrefetchScalarGridSpec(
            num_scalar_prefetch=0,
            grid=grid,
            in_specs=[
                pl.BlockSpec((1, K, 2, Pt), lambda b, t: (b, 0, 0, t)),
                pl.BlockSpec((1, K, d_in, Pt), lambda b, t: (b, 0, 0, t)),
                pl.BlockSpec((d_in, d_in), lambda b, t: (0, 0)),
                pl.BlockSpec((d_in, 2), lambda b, t: (0, 0)),
                pl.BlockSpec((d_out, d_in), lambda b, t: (0, 0)),
                pl.BlockSpec((d_out, 1), lambda b, t: (0, 0)),
            ],
            out_specs=pl.BlockSpec((1, d_out, Pt), lambda b, t: (b, 0, t)),
            scratch_shapes=[pltpu.VMEM((K, d_in, Pt), jnp.float32)],
        ),
        compiler_params=pltpu.CompilerParams(
            dimension_semantics=("parallel", "parallel")),
    )(dis_t, feat_t, wfc_feat, wfc_dis, wmlp_s, shift)

    # Output is already [B, d_out, N_pad]; slice padding, add trailing keepdim.
    return out[:, :, :N][..., None]                          # [B, d_out, N, 1]


def _reference(feature_set, f_dis, g_dis, params, *, lamda):
    """Pure-JAX reference matching the PyTorch forward (eval-mode BN)."""
    w_fc, w_mlp = params["w_fc"], params["w_mlp"]
    gamma, beta = params["bn_gamma"], params["bn_beta"]
    mean, var, eps = params["bn_mean"], params["bn_var"], params["bn_eps"]
    concat = jnp.concatenate([g_dis, f_dis * lamda, feature_set], axis=1)
    att = jnp.einsum("oc,bcnk->bonk", w_fc, concat)
    att = jax.nn.softmax(att, axis=3)
    f_lc = jnp.sum(feature_set * att, axis=-1, keepdims=True)   # [B, d_in, N, 1]
    out = jnp.einsum("oc,bcnk->bonk", w_mlp, f_lc)
    sc = (gamma / jnp.sqrt(var + eps)).reshape(1, -1, 1, 1)
    sh = (beta - mean * gamma / jnp.sqrt(var + eps)).reshape(1, -1, 1, 1)
    return jnp.maximum(out * sc + sh, 0.0)


def _make_case(key, B, d_in, d_out, N, K):
    ks = jax.random.split(key, 9)
    feature_set = jax.random.normal(ks[0], (B, d_in, N, K), dtype=jnp.float32)
    f_dis = jax.random.normal(ks[1], (B, 1, N, K), dtype=jnp.float32)
    g_dis = jax.random.normal(ks[2], (B, 1, N, K), dtype=jnp.float32)
    params = {
        "w_fc": 0.1 * jax.random.normal(ks[3], (d_in, d_in + 2), dtype=jnp.float32),
        "w_mlp": 0.1 * jax.random.normal(ks[4], (d_out, d_in), dtype=jnp.float32),
        "bn_gamma": 1.0 + 0.1 * jax.random.normal(ks[5], (d_out,), dtype=jnp.float32),
        "bn_beta": 0.1 * jax.random.normal(ks[6], (d_out,), dtype=jnp.float32),
        "bn_mean": 0.1 * jax.random.normal(ks[7], (d_out,), dtype=jnp.float32),
        "bn_var": jnp.abs(1.0 + 0.1 * jax.random.normal(ks[8], (d_out,), dtype=jnp.float32)),
        "bn_eps": 1e-5,
    }
    return feature_set, f_dis, g_dis, params


if __name__ == "__main__":
    lamda = 0.5  # config.lfa_param
    key = jax.random.PRNGKey(0)
    k1, k2 = jax.random.split(key)

    # Case 1: shapes from the original test.
    B, d_in, d_out, N, K = 2, 8, 16, 16, 8
    feature_set, f_dis, g_dis, params = _make_case(k1, B, d_in, d_out, N, K)
    out = jax.block_until_ready(
        dualdis_att_pool(feature_set, f_dis, g_dis, params, lamda=lamda))
    ref = _reference(feature_set, f_dis, g_dis, params, lamda=lamda)
    assert out.shape == (B, d_out, N, 1), out.shape
    # Tolerance loosened to 1e-3 because the softmax denominator uses the EUP
    # approximate reciprocal (typical rel. error ~1e-4).
    assert jnp.allclose(out, ref, atol=1e-3, rtol=1e-3), float(jnp.max(jnp.abs(out - ref)))

    # Case 2: non-128-multiple point count exercises the padded/ragged path.
    B, d_in, d_out, N, K = 1, 16, 32, 200, 16
    feature_set, f_dis, g_dis, params = _make_case(k2, B, d_in, d_out, N, K)
    out = jax.block_until_ready(
        dualdis_att_pool(feature_set, f_dis, g_dis, params, lamda=lamda))
    ref = _reference(feature_set, f_dis, g_dis, params, lamda=lamda)
    assert out.shape == (B, d_out, N, 1), out.shape
    assert jnp.allclose(out, ref, atol=1e-3, rtol=1e-3), float(jnp.max(jnp.abs(out - ref)))

    # TODO(synk): training-mode BatchNorm (batch statistics + running-stat update)
    # is not implemented; BN is folded in eval mode like the PyTorch module at inference.
    print("KERNEL_OK")
</pallas_src>

<mosaic_0001>
module attributes {stable_mosaic.version = 11 : i64} {
  func.func @_dualdis_att_pool_kernel(%arg0: i32, %arg1: i32, %arg2: memref<1x8x2x128xf32, #tpu.memory_space<vmem>>, %arg3: memref<1x8x8x128xf32, #tpu.memory_space<vmem>>, %arg4: memref<8x8xf32, #tpu.memory_space<vmem>>, %arg5: memref<8x2xf32, #tpu.memory_space<vmem>>, %arg6: memref<16x8xf32, #tpu.memory_space<vmem>>, %arg7: memref<16x1xf32, #tpu.memory_space<vmem>>, %arg8: memref<1x16x128xf32, #tpu.memory_space<vmem>>, %arg9: memref<8x8x128xf32, #tpu.memory_space<vmem>>) attributes {dimension_semantics = [#tpu.dimension_semantics<parallel>, #tpu.dimension_semantics<parallel>], iteration_bounds = array<i64: 2, 1>, scalar_prefetch = 0 : i64, scratch_operands = 1 : i64, tpu.core_type = #tpu.core_type<tc>, window_params = [{transform_indices = @transform_0, window_bounds = array<i64: 1, 8, 2, 128>}, {transform_indices = @transform_1, window_bounds = array<i64: 1, 8, 8, 128>}, {pipeline_mode = #tpu.pipeline_mode<synchronous>, transform_indices = @transform_2, window_bounds = array<i64: 8, 8>}, {pipeline_mode = #tpu.pipeline_mode<synchronous>, transform_indices = @transform_3, window_bounds = array<i64: 8, 2>}, {pipeline_mode = #tpu.pipeline_mode<synchronous>, transform_indices = @transform_4, window_bounds = array<i64: 16, 8>}, {pipeline_mode = #tpu.pipeline_mode<synchronous>, transform_indices = @transform_5, window_bounds = array<i64: 16, 1>}, {transform_indices = @transform_6, window_bounds = array<i64: 1, 16, 128>}]} {
    %c0 = arith.constant 0 : index
    %c0_0 = arith.constant 0 : index
    %0 = vector.load %arg4[%c0, %c0_0] : memref<8x8xf32, #tpu.memory_space<vmem>>, vector<8x8xf32>
    %c0_1 = arith.constant 0 : index
    %c0_2 = arith.constant 0 : index
    %1 = vector.load %arg5[%c0_1, %c0_2] : memref<8x2xf32, #tpu.memory_space<vmem>>, vector<8x2xf32>
    %c0_3 = arith.constant 0 : index
    %c0_4 = arith.constant 0 : index
    %c0_5 = arith.constant 0 : index
    %c0_6 = arith.constant 0 : index
    %2 = vector.load %arg3[%c0_3, %c0_4, %c0_5, %c0_6] : memref<1x8x8x128xf32, #tpu.memory_space<vmem>>, vector<1x1x8x128xf32>
    %3 = vector.shape_cast %2 : vector<1x1x8x128xf32> to vector<8x128xf32>
    %c0_7 = arith.constant 0 : index
    %c0_8 = arith.constant 0 : index
    %c0_9 = arith.constant 0 : index
    %c0_10 = arith.constant 0 : index
    %4 = vector.load %arg2[%c0_7, %c0_8, %c0_9, %c0_10] : memref<1x8x2x128xf32, #tpu.memory_space<vmem>>, vector<1x1x2x128xf32>
    %5 = vector.shape_cast %4 : vector<1x1x2x128xf32> to vector<2x128xf32>
    %cst = arith.constant dense<0.000000e+00> : vector<8x128xf32>
    %6 = tpu.matmul %0, %3, %cst {dimension_numbers = #tpu.dot_dimension_numbers<[1], [0], [0], [1], [0, 0, 1, 1], [], []>} : vector<8x8xf32>, vector<8x128xf32>, vector<8x128xf32> -> vector<8x128xf32>
    %cst_11 = arith.constant dense<0.000000e+00> : vector<8x128xf32>
    %7 = tpu.matmul %1, %5, %cst_11 {dimension_numbers = #tpu.dot_dimension_numbers<[1], [0], [0], [1], [0, 0, 1, 1], [], []>} : vector<8x2xf32>, vector<2x128xf32>, vector<8x128xf32> -> vector<8x128xf32>
    %8 = arith.addf %6, %7 : vector<8x128xf32>
    %c0_12 = arith.constant 0 : index
    %c0_13 = arith.constant 0 : index
    %c0_14 = arith.constant 0 : index
    %9 = vector.load %arg9[%c0_12, %c0_13, %c0_14] : memref<8x8x128xf32, #tpu.memory_space<vmem>>, vector<1x8x128xf32>
    %10 = vector.shape_cast %9 : vector<1x8x128xf32> to vector<8x128xf32>
    %11 = vector.shape_cast %8 : vector<8x128xf32> to vector<1x8x128xf32>
    tpu.vector_store %arg9[%c0_12, %c0_13, %c0_14], %11 {strides = array<i32>} : memref<8x8x128xf32, #tpu.memory_space<vmem>>, vector<1x8x128xf32>,
    %c0_15 = arith.constant 0 : index
    %c1 = arith.constant 1 : index
    %c0_16 = arith.constant 0 : index
    %c0_17 = arith.constant 0 : index
    %12 = vector.load %arg3[%c0_15, %c1, %c0_16, %c0_17] : memref<1x8x8x128xf32, #tpu.memory_space<vmem>>, vector<1x1x8x128xf32>
    %13 = vector.shape_cast %12 : vector<1x1x8x128xf32> to vector<8x128xf32>
    %c0_18 = arith.constant 0 : index
    %c1_19 = arith.constant 1 : index
    %c0_20 = arith.constant 0 : index
    %c0_21 = arith.constant 0 : index
    %14 = vector.load %arg2[%c0_18, %c1_19, %c0_20, %c0_21] : memref<1x8x2x128xf32, #tpu.memory_space<vmem>>, vector<1x1x2x128xf32>
    %15 = vector.shape_cast %14 : vector<1x1x2x128xf32> to vector<2x128xf32>
    %cst_22 = arith.constant dense<0.000000e+00> : vector<8x128xf32>
    %16 = tpu.matmul %0, %13, %cst_22 {dimension_numbers = #tpu.dot_dimension_numbers<[1], [0], [0], [1], [0, 0, 1, 1], [], []>} : vector<8x8xf32>, vector<8x128xf32>, vector<8x128xf32> -> vector<8x128xf32>
    %cst_23 = arith.constant dense<0.000000e+00> : vector<8x128xf32>
    %17 = tpu.matmul %1, %15, %cst_23 {dimension_numbers = #tpu.dot_dimension_numbers<[1], [0], [0], [1], [0, 0, 1, 1], [], []>} : vector<8x2xf32>, vector<2x128xf32>, vector<8x128xf32> -> vector<8x128xf32>
    %18 = arith.addf %16, %17 : vector<8x128xf32>
    %c1_24 = arith.constant 1 : index
    %c0_25 = arith.constant 0 : index
    %c0_26 = arith.constant 0 : index
    %19 = vector.load %arg9[%c1_24, %c0_25, %c0_26] : memref<8x8x128xf32, #tpu.memory_space<vmem>>, vector<1x8x128xf32>
    %20 = vector.shape_cast %19 : vector<1x8x128xf32> to vector<8x128xf32>
    %21 = vector.shape_cast %18 : vector<8x128xf32> to vector<1x8x128xf32>
    tpu.vector_store %arg9[%c1_24, %c0_25, %c0_26], %21 {strides = array<i32>} : memref<8x8x128xf32, #tpu.memory_space<vmem>>, vector<1x8x128xf32>,
    %22 = arith.maximumf %8, %18 : vector<8x128xf32>
    %c0_27 = arith.constant 0 : index
    %c2 = arith.constant 2 : index
    %c0_28 = arith.constant 0 : index
    %c0_29 = arith.constant 0 : index
    %23 = vector.load %arg3[%c0_27, %c2, %c0_28, %c0_29] : memref<1x8x8x128xf32, #tpu.memory_space<vmem>>, vector<1x1x8x128xf32>
    %24 = vector.shape_cast %23 : vector<1x1x8x128xf32> to vector<8x128xf32>
    %c0_30 = arith.constant 0 : index
    %c2_31 = arith.constant 2 : index
    %c0_32 = arith.constant 0 : index
    %c0_33 = arith.constant 0 : index
    %25 = vector.load %arg2[%c0_30, %c2_31, %c0_32, %c0_33] : memref<1x8x2x128xf32, #tpu.memory_space<vmem>>, vector<1x1x2x128xf32>
    %26 = vector.shape_cast %25 : vector<1x1x2x128xf32> to vector<2x128xf32>
    %cst_34 = arith.constant dense<0.000000e+00> : vector<8x128xf32>
    %27 = tpu.matmul %0, %24, %cst_34 {dimension_numbers = #tpu.dot_dimension_numbers<[1], [0], [0], [1], [0, 0, 1, 1], [], []>} : vector<8x8xf32>, vector<8x128xf32>, vector<8x128xf32> -> vector<8x128xf32>
    %cst_35 = arith.constant dense<0.000000e+00> : vector<8x128xf32>
    %28 = tpu.matmul %1, %26, %cst_35 {dimension_numbers = #tpu.dot_dimension_numbers<[1], [0], [0], [1], [0, 0, 1, 1], [], []>} : vector<8x2xf32>, vector<2x128xf32>, vector<8x128xf32> -> vector<8x128xf32>
    %29 = arith.addf %27, %28 : vector<8x128xf32>
    %c2_36 = arith.constant 2 : index
    %c0_37 = arith.constant 0 : index
    %c0_38 = arith.constant 0 : index
    %30 = vector.load %arg9[%c2_36, %c0_37, %c0_38] : memref<8x8x128xf32, #tpu.memory_space<vmem>>, vector<1x8x128xf32>
    %31 = vector.shape_cast %30 : vector<1x8x128xf32> to vector<8x128xf32>
    %32 = vector.shape_cast %29 : vector<8x128xf32> to vector<1x8x128xf32>
    tpu.vector_store %arg9[%c2_36, %c0_37, %c0_38], %32 {strides = array<i32>} : memref<8x8x128xf32, #tpu.memory_space<vmem>>, vector<1x8x128xf32>,
    %33 = arith.maximumf %22, %29 : vector<8x128xf32>
    %c0_39 = arith.constant 0 : index
    %c3 = arith.constant 3 : index
    %c0_40 = arith.constant 0 : index
    %c0_41 = arith.constant 0 : index
    %34 = vector.load %arg3[%c0_39, %c3, %c0_40, %c0_41] : memref<1x8x8x128xf32, #tpu.memory_space<vmem>>, vector<1x1x8x128xf32>
    %35 = vector.shape_cast %34 : vector<1x1x8x128xf32> to vector<8x128xf32>
    %c0_42 = arith.constant 0 : index
    %c3_43 = arith.constant 3 : index
    %c0_44 = arith.constant 0 : index
    %c0_45 = arith.constant 0 : index
    %36 = vector.load %arg2[%c0_42, %c3_43, %c0_44, %c0_45] : memref<1x8x2x128xf32, #tpu.memory_space<vmem>>, vector<1x1x2x128xf32>
    %37 = vector.shape_cast %36 : vector<1x1x2x128xf32> to vector<2x128xf32>
    %cst_46 = arith.constant dense<0.000000e+00> : vector<8x128xf32>
    %38 = tpu.matmul %0, %35, %cst_46 {dimension_numbers = #tpu.dot_dimension_numbers<[1], [0], [0], [1], [0, 0, 1, 1], [], []>} : vector<8x8xf32>, vector<8x128xf32>, vector<8x128xf32> -> vector<8x128xf32>
    %cst_47 = arith.constant dense<0.000000e+00> : vector<8x128xf32>
    %39 = tpu.matmul %1, %37, %cst_47 {dimension_numbers = #tpu.dot_dimension_numbers<[1], [0], [0], [1], [0, 0, 1, 1], [], []>} : vector<8x2xf32>, vector<2x128xf32>, vector<8x128xf32> -> vector<8x128xf32>
    %40 = arith.addf %38, %39 : vector<8x128xf32>
    %c3_48 = arith.constant 3 : index
    %c0_49 = arith.constant 0 : index
    %c0_50 = arith.constant 0 : index
    %41 = vector.load %arg9[%c3_48, %c0_49, %c0_50] : memref<8x8x128xf32, #tpu.memory_space<vmem>>, vector<1x8x128xf32>
    %42 = vector.shape_cast %41 : vector<1x8x128xf32> to vector<8x128xf32>
    %43 = vector.shape_cast %40 : vector<8x128xf32> to vector<1x8x128xf32>
    tpu.vector_store %arg9[%c3_48, %c0_49, %c0_50], %43 {strides = array<i32>} : memref<8x8x128xf32, #tpu.memory_space<vmem>>, vector<1x8x128xf32>,
    %44 = arith.maximumf %33, %40 : vector<8x128xf32>
    %c0_51 = arith.constant 0 : index
    %c4 = arith.constant 4 : index
    %c0_52 = arith.constant 0 : index
    %c0_53 = arith.constant 0 : index
    %45 = vector.load %arg3[%c0_51, %c4, %c0_52, %c0_53] : memref<1x8x8x128xf32, #tpu.memory_space<vmem>>, vector<1x1x8x128xf32>
    %46 = vector.shape_cast %45 : vector<1x1x8x128xf32> to vector<8x128xf32>
    %c0_54 = arith.constant 0 : index
    %c4_55 = arith.constant 4 : index
    %c0_56 = arith.constant 0 : index
    %c0_57 = arith.constant 0 : index
    %47 = vector.load %arg2[%c0_54, %c4_55, %c0_56, %c0_57] : memref<1x8x2x128xf32, #tpu.memory_space<vmem>>, vector<1x1x2x128xf32>
    %48 = vector.shape_cast %47 : vector<1x1x2x128xf32> to vector<2x128xf32>
    %cst_58 = arith.constant dense<0.000000e+00> : vector<8x128xf32>
    %49 = tpu.matmul %0, %46, %cst_58 {dimension_numbers = #tpu.dot_dimension_numbers<[1], [0], [0], [1], [0, 0, 1, 1], [], []>} : vector<8x8xf32>, vector<8x128xf32>, vector<8x128xf32> -> vector<8x128xf32>
    %cst_59 = arith.constant dense<0.000000e+00> : vector<8x128xf32>
    %50 = tpu.matmul %1, %48, %cst_59 {dimension_numbers = #tpu.dot_dimension_numbers<[1], [0], [0], [1], [0, 0, 1, 1], [], []>} : vector<8x2xf32>, vector<2x128xf32>, vector<8x128xf32> -> vector<8x128xf32>
    %51 = arith.addf %49, %50 : vector<8x128xf32>
    %c4_60 = arith.constant 4 : index
    %c0_61 = arith.constant 0 : index
    %c0_62 = arith.constant 0 : index
    %52 = vector.load %arg9[%c4_60, %c0_61, %c0_62] : memref<8x8x128xf32, #tpu.memory_space<vmem>>, vector<1x8x128xf32>
    %53 = vector.shape_cast %52 : vector<1x8x128xf32> to vector<8x128xf32>
    %54 = vector.shape_cast %51 : vector<8x128xf32> to vector<1x8x128xf32>
    tpu.vector_store %arg9[%c4_60, %c0_61, %c0_62], %54 {strides = array<i32>} : memref<8x8x128xf32, #tpu.memory_space<vmem>>, vector<1x8x128xf32>,
    %55 = arith.maximumf %44, %51 : vector<8x128xf32>
    %c0_63 = arith.constant 0 : index
    %c5 = arith.constant 5 : index
    %c0_64 = arith.constant 0 : index
    %c0_65 = arith.constant 0 : index
    %56 = vector.load %arg3[%c0_63, %c5, %c0_64, %c0_65] : memref<1x8x8x128xf32, #tpu.memory_space<vmem>>, vector<1x1x8x128xf32>
    %57 = vector.shape_cast %56 : vector<1x1x8x128xf32> to vector<8x128xf32>
    %c0_66 = arith.constant 0 : index
    %c5_67 = arith.constant 5 : index
    %c0_68 = arith.constant 0 : index
    %c0_69 = arith.constant 0 : index
    %58 = vector.load %arg2[%c0_66, %c5_67, %c0_68, %c0_69] : memref<1x8x2x128xf32, #tpu.memory_space<vmem>>, vector<1x1x2x128xf32>
    %59 = vector.shape_cast %58 : vector<1x1x2x128xf32> to vector<2x128xf32>
    %cst_70 = arith.constant dense<0.000000e+00> : vector<8x128xf32>
    %60 = tpu.matmul %0, %57, %cst_70 {dimension_numbers = #tpu.dot_dimension_numbers<[1], [0], [0], [1], [0, 0, 1, 1], [], []>} : vector<8x8xf32>, vector<8x128xf32>, vector<8x128xf32> -> vector<8x128xf32>
    %cst_71 = arith.constant dense<0.000000e+00> : vector<8x128xf32>
    %61 = tpu.matmul %1, %59, %cst_71 {dimension_numbers = #tpu.dot_dimension_numbers<[1], [0], [0], [1], [0, 0, 1, 1], [], []>} : vector<8x2xf32>, vector<2x128xf32>, vector<8x128xf32> -> vector<8x128xf32>
    %62 = arith.addf %60, %61 : vector<8x128xf32>
    %c5_72 = arith.constant 5 : index
    %c0_73 = arith.constant 0 : index
    %c0_74 = arith.constant 0 : index
    %63 = vector.load %arg9[%c5_72, %c0_73, %c0_74] : memref<8x8x128xf32, #tpu.memory_space<vmem>>, vector<1x8x128xf32>
    %64 = vector.shape_cast %63 : vector<1x8x128xf32> to vector<8x128xf32>
    %65 = vector.shape_cast %62 : vector<8x128xf32> to vector<1x8x128xf32>
    tpu.vector_store %arg9[%c5_72, %c0_73, %c0_74], %65 {strides = array<i32>} : memref<8x8x128xf32, #tpu.memory_space<vmem>>, vector<1x8x128xf32>,
    %66 = arith.maximumf %55, %62 : vector<8x128xf32>
    %c0_75 = arith.constant 0 : index
    %c6 = arith.constant 6 : index
    %c0_76 = arith.constant 0 : index
    %c0_77 = arith.constant 0 : index
    %67 = vector.load %arg3[%c0_75, %c6, %c0_76, %c0_77] : memref<1x8x8x128xf32, #tpu.memory_space<vmem>>, vector<1x1x8x128xf32>
    %68 = vector.shape_cast %67 : vector<1x1x8x128xf32> to vector<8x128xf32>
    %c0_78 = arith.constant 0 : index
    %c6_79 = arith.constant 6 : index
    %c0_80 = arith.constant 0 : index
    %c0_81 = arith.constant 0 : index
    %69 = vector.load %arg2[%c0_78, %c6_79, %c0_80, %c0_81] : memref<1x8x2x128xf32, #tpu.memory_space<vmem>>, vector<1x1x2x128xf32>
    %70 = vector.shape_cast %69 : vector<1x1x2x128xf32> to vector<2x128xf32>
    %cst_82 = arith.constant dense<0.000000e+00> : vector<8x128xf32>
    %71 = tpu.matmul %0, %68, %cst_82 {dimension_numbers = #tpu.dot_dimension_numbers<[1], [0], [0], [1], [0, 0, 1, 1], [], []>} : vector<8x8xf32>, vector<8x128xf32>, vector<8x128xf32> -> vector<8x128xf32>
    %cst_83 = arith.constant dense<0.000000e+00> : vector<8x128xf32>
    %72 = tpu.matmul %1, %70, %cst_83 {dimension_numbers = #tpu.dot_dimension_numbers<[1], [0], [0], [1], [0, 0, 1, 1], [], []>} : vector<8x2xf32>, vector<2x128xf32>, vector<8x128xf32> -> vector<8x128xf32>
    %73 = arith.addf %71, %72 : vector<8x128xf32>
    %c6_84 = arith.constant 6 : index
    %c0_85 = arith.constant 0 : index
    %c0_86 = arith.constant 0 : index
    %74 = vector.load %arg9[%c6_84, %c0_85, %c0_86] : memref<8x8x128xf32, #tpu.memory_space<vmem>>, vector<1x8x128xf32>
    %75 = vector.shape_cast %74 : vector<1x8x128xf32> to vector<8x128xf32>
    %76 = vector.shape_cast %73 : vector<8x128xf32> to vector<1x8x128xf32>
    tpu.vector_store %arg9[%c6_84, %c0_85, %c0_86], %76 {strides = array<i32>} : memref<8x8x128xf32, #tpu.memory_space<vmem>>, vector<1x8x128xf32>,
    %77 = arith.maximumf %66, %73 : vector<8x128xf32>
    %c0_87 = arith.constant 0 : index
    %c7 = arith.constant 7 : index
    %c0_88 = arith.constant 0 : index
    %c0_89 = arith.constant 0 : index
    %78 = vector.load %arg3[%c0_87, %c7, %c0_88, %c0_89] : memref<1x8x8x128xf32, #tpu.memory_space<vmem>>, vector<1x1x8x128xf32>
    %79 = vector.shape_cast %78 : vector<1x1x8x128xf32> to vector<8x128xf32>
    %c0_90 = arith.constant 0 : index
    %c7_91 = arith.constant 7 : index
    %c0_92 = arith.constant 0 : index
    %c0_93 = arith.constant 0 : index
    %80 = vector.load %arg2[%c0_90, %c7_91, %c0_92, %c0_93] : memref<1x8x2x128xf32, #tpu.memory_space<vmem>>, vector<1x1x2x128xf32>
    %81 = vector.shape_cast %80 : vector<1x1x2x128xf32> to vector<2x128xf32>
    %cst_94 = arith.constant dense<0.000000e+00> : vector<8x128xf32>
    %82 = tpu.matmul %0, %79, %cst_94 {dimension_numbers = #tpu.dot_dimension_numbers<[1], [0], [0], [1], [0, 0, 1, 1], [], []>} : vector<8x8xf32>, vector<8x128xf32>, vector<8x128xf32> -> vector<8x128xf32>
    %cst_95 = arith.constant dense<0.000000e+00> : vector<8x128xf32>
    %83 = tpu.matmul %1, %81, %cst_95 {dimension_numbers = #tpu.dot_dimension_numbers<[1], [0], [0], [1], [0, 0, 1, 1], [], []>} : vector<8x2xf32>, vector<2x128xf32>, vector<8x128xf32> -> vector<8x128xf32>
    %84 = arith.addf %82, %83 : vector<8x128xf32>
    %c7_96 = arith.constant 7 : index
    %c0_97 = arith.constant 0 : index
    %c0_98 = arith.constant 0 : index
    %85 = vector.load %arg9[%c7_96, %c0_97, %c0_98] : memref<8x8x128xf32, #tpu.memory_space<vmem>>, vector<1x8x128xf32>
    %86 = vector.shape_cast %85 : vector<1x8x128xf32> to vector<8x128xf32>
    %87 = vector.shape_cast %84 : vector<8x128xf32> to vector<1x8x128xf32>
    tpu.vector_store %arg9[%c7_96, %c0_97, %c0_98], %87 {strides = array<i32>} : memref<8x8x128xf32, #tpu.memory_space<vmem>>, vector<1x8x128xf32>,
    %88 = arith.maximumf %77, %84 : vector<8x128xf32>
    %cst_99 = arith.constant 0.000000e+00 : f32
    %89 = vector.broadcast %cst_99 : f32 to vector<8x128xf32>
    %cst_100 = arith.constant 0.000000e+00 : f32
    %90 = vector.broadcast %cst_100 : f32 to vector<8x128xf32>
    %c0_101 = arith.constant 0 : index
    %c0_102 = arith.constant 0 : index
    %c0_103 = arith.constant 0 : index
    %91 = vector.load %arg9[%c0_101, %c0_102, %c0_103] : memref<8x8x128xf32, #tpu.memory_space<vmem>>, vector<1x8x128xf32>
    %92 = vector.shape_cast %91 : vector<1x8x128xf32> to vector<8x128xf32>
    %93 = arith.subf %92, %88 : vector<8x128xf32>
    %94 = math.exp %93 : vector<8x128xf32>
    %95 = arith.addf %89, %94 : vector<8x128xf32>
    %c0_104 = arith.constant 0 : index
    %c0_105 = arith.constant 0 : index
    %c0_106 = arith.constant 0 : index
    %c0_107 = arith.constant 0 : index
    %96 = vector.load %arg3[%c0_104, %c0_105, %c0_106, %c0_107] : memref<1x8x8x128xf32, #tpu.memory_space<vmem>>, vector<1x1x8x128xf32>
    %97 = vector.shape_cast %96 : vector<1x1x8x128xf32> to vector<8x128xf32>
    %98 = arith.mulf %97, %94 : vector<8x128xf32>
    %99 = arith.addf %90, %98 : vector<8x128xf32>
    %c1_108 = arith.constant 1 : index
    %c0_109 = arith.constant 0 : index
    %c0_110 = arith.constant 0 : index
    %100 = vector.load %arg9[%c1_108, %c0_109, %c0_110] : memref<8x8x128xf32, #tpu.memory_space<vmem>>, vector<1x8x128xf32>
    %101 = vector.shape_cast %100 : vector<1x8x128xf32> to vector<8x128xf32>
    %102 = arith.subf %101, %88 : vector<8x128xf32>
    %103 = math.exp %102 : vector<8x128xf32>
    %104 = arith.addf %95, %103 : vector<8x128xf32>
    %c0_111 = arith.constant 0 : index
    %c1_112 = arith.constant 1 : index
    %c0_113 = arith.constant 0 : index
    %c0_114 = arith.constant 0 : index
    %105 = vector.load %arg3[%c0_111, %c1_112, %c0_113, %c0_114] : memref<1x8x8x128xf32, #tpu.memory_space<vmem>>, vector<1x1x8x128xf32>
    %106 = vector.shape_cast %105 : vector<1x1x8x128xf32> to vector<8x128xf32>
    %107 = arith.mulf %106, %103 : vector<8x128xf32>
    %108 = arith.addf %99, %107 : vector<8x128xf32>
    %c2_115 = arith.constant 2 : index
    %c0_116 = arith.constant 0 : index
    %c0_117 = arith.constant 0 : index
    %109 = vector.load %arg9[%c2_115, %c0_116, %c0_117] : memref<8x8x128xf32, #tpu.memory_space<vmem>>, vector<1x8x128xf32>
    %110 = vector.shape_cast %109 : vector<1x8x128xf32> to vector<8x128xf32>
    %111 = arith.subf %110, %88 : vector<8x128xf32>
    %112 = math.exp %111 : vector<8x128xf32>
    %113 = arith.addf %104, %112 : vector<8x128xf32>
    %c0_118 = arith.constant 0 : index
    %c2_119 = arith.constant 2 : index
    %c0_120 = arith.constant 0 : index
    %c0_121 = arith.constant 0 : index
    %114 = vector.load %arg3[%c0_118, %c2_119, %c0_120, %c0_121] : memref<1x8x8x128xf32, #tpu.memory_space<vmem>>, vector<1x1x8x128xf32>
    %115 = vector.shape_cast %114 : vector<1x1x8x128xf32> to vector<8x128xf32>
    %116 = arith.mulf %115, %112 : vector<8x128xf32>
    %117 = arith.addf %108, %116 : vector<8x128xf32>
    %c3_122 = arith.constant 3 : index
    %c0_123 = arith.constant 0 : index
    %c0_124 = arith.constant 0 : index
    %118 = vector.load %arg9[%c3_122, %c0_123, %c0_124] : memref<8x8x128xf32, #tpu.memory_space<vmem>>, vector<1x8x128xf32>
    %119 = vector.shape_cast %118 : vector<1x8x128xf32> to vector<8x128xf32>
    %120 = arith.subf %119, %88 : vector<8x128xf32>
    %121 = math.exp %120 : vector<8x128xf32>
    %122 = arith.addf %113, %121 : vector<8x128xf32>
    %c0_125 = arith.constant 0 : index
    %c3_126 = arith.constant 3 : index
    %c0_127 = arith.constant 0 : index
    %c0_128 = arith.constant 0 : index
    %123 = vector.load %arg3[%c0_125, %c3_126, %c0_127, %c0_128] : memref<1x8x8x128xf32, #tpu.memory_space<vmem>>, vector<1x1x8x128xf32>
    %124 = vector.shape_cast %123 : vector<1x1x8x128xf32> to vector<8x128xf32>
    %125 = arith.mulf %124, %121 : vector<8x128xf32>
    %126 = arith.addf %117, %125 : vector<8x128xf32>
    %c4_129 = arith.constant 4 : index
    %c0_130 = arith.constant 0 : index
    %c0_131 = arith.constant 0 : index
    %127 = vector.load %arg9[%c4_129, %c0_130, %c0_131] : memref<8x8x128xf32, #tpu.memory_space<vmem>>, vector<1x8x128xf32>
    %128 = vector.shape_cast %127 : vector<1x8x128xf32> to vector<8x128xf32>
    %129 = arith.subf %128, %88 : vector<8x128xf32>
    %130 = math.exp %129 : vector<8x128xf32>
    %131 = arith.addf %122, %130 : vector<8x128xf32>
    %c0_132 = arith.constant 0 : index
    %c4_133 = arith.constant 4 : index
    %c0_134 = arith.constant 0 : index
    %c0_135 = arith.constant 0 : index
    %132 = vector.load %arg3[%c0_132, %c4_133, %c0_134, %c0_135] : memref<1x8x8x128xf32, #tpu.memory_space<vmem>>, vector<1x1x8x128xf32>
    %133 = vector.shape_cast %132 : vector<1x1x8x128xf32> to vector<8x128xf32>
    %134 = arith.mulf %133, %130 : vector<8x128xf32>
    %135 = arith.addf %126, %134 : vector<8x128xf32>
    %c5_136 = arith.constant 5 : index
    %c0_137 = arith.constant 0 : index
    %c0_138 = arith.constant 0 : index
    %136 = vector.load %arg9[%c5_136, %c0_137, %c0_138] : memref<8x8x128xf32, #tpu.memory_space<vmem>>, vector<1x8x128xf32>
    %137 = vector.shape_cast %136 : vector<1x8x128xf32> to vector<8x128xf32>
    %138 = arith.subf %137, %88 : vector<8x128xf32>
    %139 = math.exp %138 : vector<8x128xf32>
    %140 = arith.addf %131, %139 : vector<8x128xf32>
    %c0_139 = arith.constant 0 : index
    %c5_140 = arith.constant 5 : index
    %c0_141 = arith.constant 0 : index
    %c0_142 = arith.constant 0 : index
    %141 = vector.load %arg3[%c0_139, %c5_140, %c0_141, %c0_142] : memref<1x8x8x128xf32, #tpu.memory_space<vmem>>, vector<1x1x8x128xf32>
    %142 = vector.shape_cast %141 : vector<1x1x8x128xf32> to vector<8x128xf32>
    %143 = arith.mulf %142, %139 : vector<8x128xf32>
    %144 = arith.addf %135, %143 : vector<8x128xf32>
    %c6_143 = arith.constant 6 : index
    %c0_144 = arith.constant 0 : index
    %c0_145 = arith.constant 0 : index
    %145 = vector.load %arg9[%c6_143, %c0_144, %c0_145] : memref<8x8x128xf32, #tpu.memory_space<vmem>>, vector<1x8x128xf32>
    %146 = vector.shape_cast %145 : vector<1x8x128xf32> to vector<8x128xf32>
    %147 = arith.subf %146, %88 : vector<8x128xf32>
    %148 = math.exp %147 : vector<8x128xf32>
    %149 = arith.addf %140, %148 : vector<8x128xf32>
    %c0_146 = arith.constant 0 : index
    %c6_147 = arith.constant 6 : index
    %c0_148 = arith.constant 0 : index
    %c0_149 = arith.constant 0 : index
    %150 = vector.load %arg3[%c0_146, %c6_147, %c0_148, %c0_149] : memref<1x8x8x128xf32, #tpu.memory_space<vmem>>, vector<1x1x8x128xf32>
    %151 = vector.shape_cast %150 : vector<1x1x8x128xf32> to vector<8x128xf32>
    %152 = arith.mulf %151, %148 : vector<8x128xf32>
    %153 = arith.addf %144, %152 : vector<8x128xf32>
    %c7_150 = arith.constant 7 : index
    %c0_151 = arith.constant 0 : index
    %c0_152 = arith.constant 0 : index
    %154 = vector.load %arg9[%c7_150, %c0_151, %c0_152] : memref<8x8x128xf32, #tpu.memory_space<vmem>>, vector<1x8x128xf32>
    %155 = vector.shape_cast %154 : vector<1x8x128xf32> to vector<8x128xf32>
    %156 = arith.subf %155, %88 : vector<8x128xf32>
    %157 = math.exp %156 : vector<8x128xf32>
    %158 = arith.addf %149, %157 : vector<8x128xf32>
    %c0_153 = arith.constant 0 : index
    %c7_154 = arith.constant 7 : index
    %c0_155 = arith.constant 0 : index
    %c0_156 = arith.constant 0 : index
    %159 = vector.load %arg3[%c0_153, %c7_154, %c0_155, %c0_156] : memref<1x8x8x128xf32, #tpu.memory_space<vmem>>, vector<1x1x8x128xf32>
    %160 = vector.shape_cast %159 : vector<1x1x8x128xf32> to vector<8x128xf32>
    %161 = arith.mulf %160, %157 : vector<8x128xf32>
    %162 = arith.addf %153, %161 : vector<8x128xf32>
    %163 = tpu.reciprocal %158 {approx = true} : vector<8x128xf32> -> vector<8x128xf32>
    %164 = arith.mulf %162, %163 : vector<8x128xf32>
    %c0_157 = arith.constant 0 : index
    %c0_158 = arith.constant 0 : index
    %165 = vector.load %arg6[%c0_157, %c0_158] : memref<16x8xf32, #tpu.memory_space<vmem>>, vector<16x8xf32>
    %cst_159 = arith.constant dense<0.000000e+00> : vector<16x128xf32>
    %166 = tpu.matmul %165, %164, %cst_159 {dimension_numbers = #tpu.dot_dimension_numbers<[1], [0], [0], [1], [0, 0, 1, 1], [], []>} : vector<16x8xf32>, vector<8x128xf32>, vector<16x128xf32> -> vector<16x128xf32>
    %c0_160 = arith.constant 0 : index
    %c0_161 = arith.constant 0 : index
    %167 = vector.load %arg7[%c0_160, %c0_161] : memref<16x1xf32, #tpu.memory_space<vmem>>, vector<16x1xf32>
    %168 = vector.broadcast %167 : vector<16x1xf32> to vector<16x128xf32>
    %169 = arith.addf %166, %168 : vector<16x128xf32>
    %cst_162 = arith.constant 0.000000e+00 : f32
    %170 = vector.broadcast %cst_162 : f32 to vector<16x128xf32>
    %171 = arith.maximumf %169, %170 : vector<16x128xf32>
    %c0_163 = arith.constant 0 : index
    %c0_164 = arith.constant 0 : index
    %c0_165 = arith.constant 0 : index
    %172 = vector.load %arg8[%c0_163, %c0_164, %c0_165] : memref<1x16x128xf32, #tpu.memory_space<vmem>>, vector<1x16x128xf32>
    %173 = vector.shape_cast %172 : vector<1x16x128xf32> to vector<16x128xf32>
    %174 = vector.shape_cast %171 : vector<16x128xf32> to vector<1x16x128xf32>
    tpu.vector_store %arg8[%c0_163, %c0_164, %c0_165], %174 {strides = array<i32>} : memref<1x16x128xf32, #tpu.memory_space<vmem>>, vector<1x16x128xf32>,
    return
  }
  func.func @transform_0(%arg0: i32, %arg1: i32) -> (i32, i32, i32, i32) {
    %c0_i32 = arith.constant 0 : i32
    %c0_i32_0 = arith.constant 0 : i32
    %c0_i32_1 = arith.constant 0 : i32
    return %arg0, %c0_i32, %c0_i32_0, %arg1 : i32, i32, i32, i32
  }
  func.func @transform_1(%arg0: i32, %arg1: i32) -> (i32, i32, i32, i32) {
    %c0_i32 = arith.constant 0 : i32
    %c0_i32_0 = arith.constant 0 : i32
    %c0_i32_1 = arith.constant 0 : i32
    return %arg0, %c0_i32, %c0_i32_0, %arg1 : i32, i32, i32, i32
  }
  func.func @transform_2(%arg0: i32, %arg1: i32) -> (i32, i32) {
    %c0_i32 = arith.constant 0 : i32
    %c0_i32_0 = arith.constant 0 : i32
    %c0_i32_1 = arith.constant 0 : i32
    return %c0_i32, %c0_i32_0 : i32, i32
  }
  func.func @transform_3(%arg0: i32, %arg1: i32) -> (i32, i32) {
    %c0_i32 = arith.constant 0 : i32
    %c0_i32_0 = arith.constant 0 : i32
    %c0_i32_1 = arith.constant 0 : i32
    return %c0_i32, %c0_i32_0 : i32, i32
  }
  func.func @transform_4(%arg0: i32, %arg1: i32) -> (i32, i32) {
    %c0_i32 = arith.constant 0 : i32
    %c0_i32_0 = arith.constant 0 : i32
    %c0_i32_1 = arith.constant 0 : i32
    return %c0_i32, %c0_i32_0 : i32, i32
  }
  func.func @transform_5(%arg0: i32, %arg1: i32) -> (i32, i32) {
    %c0_i32 = arith.constant 0 : i32
    %c0_i32_0 = arith.constant 0 : i32
    %c0_i32_1 = arith.constant 0 : i32
    return %c0_i32, %c0_i32_0 : i32, i32
  }
  func.func @transform_6(%arg0: i32, %arg1: i32) -> (i32, i32, i32) {
    %c0_i32 = arith.constant 0 : i32
    %c0_i32_0 = arith.constant 0 : i32
    return %arg0, %c0_i32, %arg1 : i32, i32, i32
  }
}

</mosaic_0001>

<llo_original>
// kernel: tpu_custom_call.1
$region0: #{tpu_custom_call.1}
  #allocation0 [shape = 'u32[]', space=smem, size = 0x4, offset = 0x4, fixed_abs, tag = 'smem constant byte address 0x4 - core index']
  #allocation1 [shape = 'u32[144,128]{1,0:T(1,128)}', space=vmem, size = 0x12000, scoped, tag = 'internal scratch']
  #allocation2 [shape = 'f32[8,8,128]{2,1,0:T(8,128)}', space=vmem, size = 0x8000, scoped, tag = 'scratch operand']
  %s0 = inlined_call_operand.vmem [shape: f32[2,8,2,128], index: 0, kind: input, shape index: {}]
  %s1 = inlined_call_operand.hbm [shape: f32[2,8,8,128], index: 1, kind: input, shape index: {}]
  %s2 = inlined_call_operand.vmem [shape: f32[8,8], index: 2, kind: input, shape index: {}]
  %s3 = inlined_call_operand.vmem [shape: f32[8,2], index: 3, kind: input, shape index: {}]
  %s4 = inlined_call_operand.vmem [shape: f32[16,8], index: 4, kind: input, shape index: {}]
  %s5 = inlined_call_operand.vmem [shape: f32[16,1], index: 5, kind: input, shape index: {}]
  %s6 = inlined_call_operand.hbm [shape: f32[2,16,128], index: 6, kind: output, shape index: {}]
  %s7 = sld [smem:[#allocation0]]
  $region61: #{tpu_custom_call.1} parent=0
    _
  %s9 = ssub.s32 1, %s7
  %s10 = scalar_select 0, %s9, %s7
  $region1: #{tpu_custom_call.1} parent=0
    #allocation3 [shape = 'u8[65536]{0}', space=vmem, size = 0x10000, scoped, tag = 'input window, operand 1']
    #allocation4 [shape = 's32[2]{0}', space=sflag, size = 0x8, scoped, tag = 'scoped memory for tpu_custom_call.1']
    #allocation5 [shape = 's32[2]{0}', space=sflag, size = 0x8, scoped, tag = 'scoped memory for tpu_custom_call.1']
    #allocation6 [shape = 'u8[16384]{0}', space=vmem, size = 0x4000, scoped, tag = 'output window, operand 0']
    %11 = vsyncpa [#allocation4], 0
    %s12 = scalar_lea.sflag [#allocation4], 1
    %13 = vsyncpa %s12, 0
    %14 = vsyncpa [#allocation5], 0
    %s15 = scalar_lea.sflag [#allocation5], 1
    %16 = vsyncpa %s15, 0
    loop: start=0, step=1, limit=4
    $region2: #{tpu_custom_call.1} parent=1 // loop_pre_header
      _
    $region3: #{tpu_custom_call.1} parent=1 // loop_header
      %s18 = sphi 0, %s22
      %p19 = scmp.ge.s32.totalorder %s18, 4
      %s25 = sphi 0, %s37
      %s26 = sphi 0, %s33
      %s27 = sphi 0, %s25
      %s28 = sphi 0, %s26
      %s29 = sphi 0, %s27
      %s30 = sphi 0, %s28
      %s42 = sphi 0, %s44
      %s45 = sphi 0, %s42
      %s46 = sphi 0, %s45
      %s62 = sphi 0, %s46
      %s70 = sphi 0, %s72
      %s73 = sphi 0, %s70
      %s74 = sphi 0, %s73
      %s90 = sphi 0, %s74
      %s94 = sphi 0, %s94
      %s96 = sphi 0, %s94
      %s97 = sphi 0, %s96
      %s111 = sphi 0, %s97
      %s115 = sphi 0, %s115
      %s117 = sphi 0, %s115
      %s118 = sphi 0, %s117
      %s132 = sphi 0, %s118
      %s136 = sphi 0, %s136
      %s138 = sphi 0, %s136
      %s139 = sphi 0, %s138
      %s153 = sphi 0, %s139
      %s157 = sphi 0, %s157
      %s159 = sphi 0, %s157
      %s160 = sphi 0, %s159
      %s174 = sphi 0, %s160
      %s182 = sphi 0, %s184
      %s185 = sphi 0, %s182
      %s186 = sphi 0, %s185
      %s202 = sphi 0, %s186
    $region4: #{tpu_custom_call.1} parent=1 // loop_header_branch
      %21 = sbr.rel (%p19) target = $region8
    $region5: #{tpu_custom_call.1} parent=1 // loop_body
      %s23 = ssub.s32 %s18, 1
      %s24 = ssub.s32 %s18, 2
      %s31 = sadd.s32 1, %s26
      %p32 = scmp.ge.s32.totalorder %s31, 1
      %s33 = scalar_select %p32, 0, %s31
      %s34 = sadd.s32 1, %s25
      %s35 = scalar_select %p32, %s34, %s25
      %p36 = scmp.ge.s32.totalorder %s35, 2
      %s37 = scalar_select %p36, 0, %s35
      %s38 = ssub.s32 %s25, %s37
      %s39 = ssub.s32 %s26, %s33
      %s40 = sor.u32 %s38, %s39
      %p41 = scmp.eq.s32.totalorder %s40, 0
      %s43 = sadd.s32 %s42, 1
      %s44 = scalar_select %p41, %s42, %s43
      %p47 = pneg %p41
      %p48 = scmp.eq.s32.totalorder %s18, 1
      %p49 = por %p47, %p48
      %p50 = scmp.ne.s32.totalorder %s42, %s45
      %p51 = scmp.eq.s32.totalorder %s18, 0
      %p52 = por %p50, %p51
      %p53 = scmp.ne.s32.totalorder %s42, %s45
      %p54 = scmp.eq.s32.totalorder %s23, 1
      %p55 = por %p53, %p54
      %p56 = scmp.ne.s32.totalorder %s45, %s46
      %p57 = scmp.eq.s32.totalorder %s23, 0
      %p58 = por %p56, %p57
      %p59 = scmp.ne.s32.totalorder %s45, %s46
      %p60 = scmp.eq.s32.totalorder %s24, 1
      %p61 = por %p59, %p60
      %p63 = scmp.ne.s32.totalorder %s46, %s62
      %p64 = scmp.eq.s32.totalorder %s24, 0
      %p65 = por %p63, %p64
      %s66 = ssub.s32 %s25, %s37
      %s67 = ssub.s32 %s26, %s33
      %s68 = sor.u32 %s66, %s67
      %p69 = scmp.eq.s32.totalorder %s68, 0
      %s71 = sadd.s32 %s70, 1
      %s72 = scalar_select %p69, %s70, %s71
      %p75 = pneg %p69
      %p76 = scmp.eq.s32.totalorder %s18, 1
      %p77 = por %p75, %p76
      %p78 = scmp.ne.s32.totalorder %s70, %s73
      %p79 = scmp.eq.s32.totalorder %s18, 0
      %p80 = por %p78, %p79
      %p81 = scmp.ne.s32.totalorder %s70, %s73
      %p82 = scmp.eq.s32.totalorder %s23, 1
      %p83 = por %p81, %p82
      %p84 = scmp.ne.s32.totalorder %s73, %s74
      %p85 = scmp.eq.s32.totalorder %s23, 0
      %p86 = por %p84, %p85
      %p87 = scmp.ne.s32.totalorder %s73, %s74
      %p88 = scmp.eq.s32.totalorder %s24, 1
      %p89 = por %p87, %p88
      %p91 = scmp.ne.s32.totalorder %s74, %s90
      %p92 = scmp.eq.s32.totalorder %s24, 0
      %p93 = por %p91, %p92
      %s95 = sadd.s32 %s94, 1
      %p98 = scmp.eq.s32.totalorder %s18, 1
      %p99 = scmp.ne.s32.totalorder %s94, %s96
      %p100 = scmp.eq.s32.totalorder %s18, 0
      %p101 = por %p99, %p100
      %p102 = scmp.ne.s32.totalorder %s94, %s96
      %p103 = scmp.eq.s32.totalorder %s23, 1
      %p104 = por %p102, %p103
      %p105 = scmp.ne.s32.totalorder %s96, %s97
      %p106 = scmp.eq.s32.totalorder %s23, 0
      %p107 = por %p105, %p106
      %p108 = scmp.ne.s32.totalorder %s96, %s97
      %p109 = scmp.eq.s32.totalorder %s24, 1
      %p110 = por %p108, %p109
      %p112 = scmp.ne.s32.totalorder %s97, %s111
      %p113 = scmp.eq.s32.totalorder %s24, 0
      %p114 = por %p112, %p113
      %s116 = sadd.s32 %s115, 1
      %p119 = scmp.eq.s32.totalorder %s18, 1
      %p120 = scmp.ne.s32.totalorder %s115, %s117
      %p121 = scmp.eq.s32.totalorder %s18, 0
      %p122 = por %p120, %p121
      %p123 = scmp.ne.s32.totalorder %s115, %s117
      %p124 = scmp.eq.s32.totalorder %s23, 1
      %p125 = por %p123, %p124
      %p126 = scmp.ne.s32.totalorder %s117, %s118
      %p127 = scmp.eq.s32.totalorder %s23, 0
      %p128 = por %p126, %p127
      %p129 = scmp.ne.s32.totalorder %s117, %s118
      %p130 = scmp.eq.s32.totalorder %s24, 1
      %p131 = por %p129, %p130
      %p133 = scmp.ne.s32.totalorder %s118, %s132
      %p134 = scmp.eq.s32.totalorder %s24, 0
      %p135 = por %p133, %p134
      %s137 = sadd.s32 %s136, 1
      %p140 = scmp.eq.s32.totalorder %s18, 1
      %p141 = scmp.ne.s32.totalorder %s136, %s138
      %p142 = scmp.eq.s32.totalorder %s18, 0
      %p143 = por %p141, %p142
      %p144 = scmp.ne.s32.totalorder %s136, %s138
      %p145 = scmp.eq.s32.totalorder %s23, 1
      %p146 = por %p144, %p145
      %p147 = scmp.ne.s32.totalorder %s138, %s139
      %p148 = scmp.eq.s32.totalorder %s23, 0
      %p149 = por %p147, %p148
      %p150 = scmp.ne.s32.totalorder %s138, %s139
      %p151 = scmp.eq.s32.totalorder %s24, 1
      %p152 = por %p150, %p151
      %p154 = scmp.ne.s32.totalorder %s139, %s153
      %p155 = scmp.eq.s32.totalorder %s24, 0
      %p156 = por %p154, %p155
      %s158 = sadd.s32 %s157, 1
      %p161 = scmp.eq.s32.totalorder %s18, 1
      %p162 = scmp.ne.s32.totalorder %s157, %s159
      %p163 = scmp.eq.s32.totalorder %s18, 0
      %p164 = por %p162, %p163
      %p165 = scmp.ne.s32.totalorder %s157, %s159
      %p166 = scmp.eq.s32.totalorder %s23, 1
      %p167 = por %p165, %p166
      %p168 = scmp.ne.s32.totalorder %s159, %s160
      %p169 = scmp.eq.s32.totalorder %s23, 0
      %p170 = por %p168, %p169
      %p171 = scmp.ne.s32.totalorder %s159, %s160
      %p172 = scmp.eq.s32.totalorder %s24, 1
      %p173 = por %p171, %p172
      %p175 = scmp.ne.s32.totalorder %s160, %s174
      %p176 = scmp.eq.s32.totalorder %s24, 0
      %p177 = por %p175, %p176
      %s178 = ssub.s32 %s25, %s37
      %s179 = ssub.s32 %s26, %s33
      %s180 = sor.u32 %s178, %s179
      %p181 = scmp.eq.s32.totalorder %s180, 0
      %s183 = sadd.s32 %s182, 1
      %s184 = scalar_select %p181, %s182, %s183
      %p187 = pneg %p181
      %p188 = scmp.eq.s32.totalorder %s18, 1
      %p189 = por %p187, %p188
      %p190 = scmp.ne.s32.totalorder %s182, %s185
      %p191 = scmp.eq.s32.totalorder %s18, 0
      %p192 = por %p190, %p191
      %p193 = scmp.ne.s32.totalorder %s182, %s185
      %p194 = scmp.eq.s32.totalorder %s23, 1
      %p195 = por %p193, %p194
      %p196 = scmp.ne.s32.totalorder %s185, %s186
      %p197 = scmp.eq.s32.totalorder %s23, 0
      %p198 = por %p196, %p197
      %p199 = scmp.ne.s32.totalorder %s185, %s186
      %p200 = scmp.eq.s32.totalorder %s24, 1
      %p201 = por %p199, %p200
      %p203 = scmp.ne.s32.totalorder %s186, %s202
      %p204 = scmp.eq.s32.totalorder %s24, 0
      %p205 = por %p203, %p204
      %p206 = scmp.le.s32.totalorder 1, %s18
      %p207 = scmp.lt.s32.totalorder %s18, 3
      %p208 = pnand %p206, %p207
      %p209 = pneg %p208
      // Predicated region
      $region9: #{tpu_custom_call.1} parent=5 // pred_check
        _
      $region10: #{tpu_custom_call.1} parent=5 // pred_check_branch
        %211 = sbr.rel (%p208) target = $region12
      $region11: #{tpu_custom_call.1} parent=5 // pred_region
        %s212 = ssub.s32 %s18, 1
        // Predicated region
        $region13: #{tpu_custom_call.1} parent=11 // pred_check
          %p213 = pneg %p107
        $region14: #{tpu_custom_call.1} parent=11 // pred_check_branch
          %215 = sbr.rel (%p213) target = $region16
        $region15: #{tpu_custom_call.1} parent=11 // pred_region
          _
        $region16: #{tpu_custom_call.1} parent=11 // pred_fallthru
          _
        // Predicated region
        $region17: #{tpu_custom_call.1} parent=11 // pred_check
          %p216 = pneg %p128
        $region18: #{tpu_custom_call.1} parent=11 // pred_check_branch
          %218 = sbr.rel (%p216) target = $region20
        $region19: #{tpu_custom_call.1} parent=11 // pred_region
          _
        $region20: #{tpu_custom_call.1} parent=11 // pred_fallthru
          _
        // Predicated region
        $region21: #{tpu_custom_call.1} parent=11 // pred_check
          %p219 = pneg %p149
        $region22: #{tpu_custom_call.1} parent=11 // pred_check_branch
          %221 = sbr.rel (%p219) target = $region24
        $region23: #{tpu_custom_call.1} parent=11 // pred_region
          _
        $region24: #{tpu_custom_call.1} parent=11 // pred_fallthru
          _
        // Predicated region
        $region25: #{tpu_custom_call.1} parent=11 // pred_check
          %p222 = pneg %p170
        $region26: #{tpu_custom_call.1} parent=11 // pred_check_branch
          %224 = sbr.rel (%p222) target = $region28
        $region27: #{tpu_custom_call.1} parent=11 // pred_region
          _
        $region28: #{tpu_custom_call.1} parent=11 // pred_fallthru
          _
      $region12: #{tpu_custom_call.1} parent=5 // pred_fallthru
        _
      %p225 = scmp.lt.s32.totalorder %s18, 2
      // Predicated region
      $region29: #{tpu_custom_call.1} parent=5 // pred_check
        %p226 = pneg %p225
      $region30: #{tpu_custom_call.1} parent=5 // pred_check_branch
        %228 = sbr.rel (%p226) target = $region32
      $region31: #{tpu_custom_call.1} parent=5 // pred_region
        // Predicated region
        $region33: #{tpu_custom_call.1} parent=31 // pred_check
          %p229 = pneg %p52
        $region34: #{tpu_custom_call.1} parent=31 // pred_check_branch
          %231 = sbr.rel (%p229) target = $region36
        $region35: #{tpu_custom_call.1} parent=31 // pred_region
          %p232 = scmp.lt.s32.totalorder %s25, 1
          %s233 = scalar_select %p232, %s25, 1
          %p234 = scmp.lt.s32.totalorder %s26, 0
          %s235 = scalar_select %p234, %s26, 0
          %s236 = smul.addr %s233, 8
          %s237 = sadd.s32 %s235, %s236
          %s238 = smul.addr %s237, 2
          %s239 = scalar_lea.vmem %s0, %s238
        $region36: #{tpu_custom_call.1} parent=31 // pred_fallthru
          _
        // Predicated region
        $region37: #{tpu_custom_call.1} parent=31 // pred_check
          %p240 = pneg %p80
        $region38: #{tpu_custom_call.1} parent=31 // pred_check_branch
          %242 = sbr.rel (%p240) target = $region40
        $region39: #{tpu_custom_call.1} parent=31 // pred_region
          %s243 = sand.u32 %s70, 1
          %s244 = scalar_lea.sflag [#allocation4], %s243
          %s245 = sand.u32 %s70, 1
          %s246 = smul.addr %s245, 64
          %s247 = scalar_lea.vmem [#allocation3], %s246
          %s249 = ssub.s32 1024, 1024
          %250 = vsyncadd %s244, %s249
          %s251 = smul.addr %s25, 8
          %s252 = sadd.s32 %s26, %s251
          %s253 = smul.addr %s252, 128
          %s254 = scalar_lea.hbm %s1, %s253
          %s255 = sshll.u32 %s247, 4
          %s256 = int_to_ptr.vmem [resolvable:$true] %s255
          %261 = dma.hbm_to_vmem [thread:$0]  %s254, 1024, %s256, %s244, 128, 128, 8
        $region40: #{tpu_custom_call.1} parent=31 // pred_fallthru
          _
      $region32: #{tpu_custom_call.1} parent=5 // pred_fallthru
        _
      %p262 = scmp.le.s32.totalorder 1, %s18
      %p263 = scmp.lt.s32.totalorder %s18, 3
      %p264 = pnand %p262, %p263
      %p265 = pneg %p264
      // Predicated region
      $region41: #{tpu_custom_call.1} parent=5 // pred_check
        _
      $region42: #{tpu_custom_call.1} parent=5 // pred_check_branch
        %267 = sbr.rel (%p264) target = $region44
      $region43: #{tpu_custom_call.1} parent=5 // pred_region
        %s268 = ssub.s32 %s18, 1
        %s269 = sand.u32 %s73, 1
        %s270 = scalar_lea.sflag [#allocation4], %s269
        %s271 = sand.u32 %s73, 1
        %s272 = smul.addr %s271, 64
        %s273 = scalar_lea.vmem [#allocation3], %s272
        // Predicated region
        $region45: #{tpu_custom_call.1} parent=43 // pred_check
          %p274 = pneg %p86
        $region46: #{tpu_custom_call.1} parent=43 // pred_check_branch
          %276 = sbr.rel (%p274) target = $region48
        $region47: #{tpu_custom_call.1} parent=43 // pred_region
          %277 = dma.done %s270, 1024
        $region48: #{tpu_custom_call.1} parent=43 // pred_fallthru
          _
        %p278 = scmp.lt.s32.totalorder %s27, 1
        %s279 = scalar_select %p278, %s27, 1
        %p280 = scmp.lt.s32.totalorder %s28, 0
        %s281 = scalar_select %p280, %s28, 0
        %s282 = smul.addr %s279, 8
        %s283 = sadd.s32 %s281, %s282
        %s284 = smul.addr %s283, 2
        %s285 = scalar_lea.vmem %s0, %s284
        %p286 = pneg %p58
        %p287 = pneg %p55
        %s288 = sand.u32 %s73, 1
        %s289 = scalar_lea.sflag [#allocation4], %s288
        %s290 = sand.u32 %s73, 1
        %s291 = smul.addr %s290, 64
        %s292 = scalar_lea.vmem [#allocation3], %s291
        %p293 = pneg %p86
        %p294 = pneg %p83
        %p295 = pneg %p107
        %p296 = pneg %p104
        %p297 = pneg %p128
        %p298 = pneg %p125
        %p299 = pneg %p149
        %p300 = pneg %p146
        %p301 = pneg %p170
        %p302 = pneg %p167
        %p303 = pneg %p198
        %p304 = pneg %p195
        %s305 = sand.u32 %s185, 1
        %s306 = scalar_lea.sflag [#allocation5], %s305
        %s307 = sand.u32 %s185, 1
        %s308 = smul.addr %s307, 16
        %s309 = scalar_lea.vmem [#allocation6], %s308
        %p310 = scmp.lt.s32.totalorder %s27, 1
        %s311 = scalar_select %p310, %s27, 1
        %p312 = scmp.lt.s32.totalorder %s28, 0
        %s313 = scalar_select %p312, %s28, 0
        %s314 = smul.addr %s311, 8
        %s315 = sadd.s32 %s313, %s314
        %s316 = smul.addr %s315, 2
        %s317 = scalar_lea.vmem %s0, %s316
        %v318 = vld [vmem:[%s2] sm:$0xff]
        %v319 = vld [vmem:[%s3] sm:$0xff]
        %v320 = vld [vmem:[%s273] sm:$0xff]
        %v321 = vld [vmem:[%s317] sm:$0x3]
        %vm322 = vcmask 15360
        %v324 = vsel %vm322, %v319, 0
        %vm326 = vcmask 1041408
        %v328 = vsel %vm326, %v321, 0
        %330 = vmatprep.subr.mxu0 0.0
        %331 = vmatpush1.msra.mxu0 0.0
        %332 = vmatprep.subr.mxu0 0.0
        %333 = vmatpush1.msra.mxu0 0.0
        %334 = vmatprep.subr.mxu0 0.0
        %335 = vmatpush1.msra.mxu0 0.0
        %336 = vmatprep.subr.mxu0 0.0
        %337 = vmatpush1.msra.mxu0 0.0
        %338 = vmatprep.subr.mxu0 0.0
        %339 = vmatpush1.msra.mxu0 0.0
        %340 = vmatprep.subr.mxu0 0.0
        %341 = vmatpush1.msra.mxu0 0.0
        %342 = vmatprep.subr.mxu0 0.0
        %343 = vmatpush1.msra.mxu0 0.0
        %344 = vmatprep.subr.mxu0 0.0
        %345 = vmatpush1.msra.mxu0 0.0
        %346 = vmatprep.subr.mxu0 0.0
        %347 = vmatpush1.msra.mxu0 0.0
        %348 = vmatprep.subr.mxu0 0.0
        %349 = vmatpush1.msra.mxu0 0.0
        %350 = vmatprep.subr.mxu0 0.0
        %351 = vmatpush1.msra.mxu0 0.0
        %352 = vmatprep.subr.mxu0 0.0
        %353 = vmatpush1.msra.mxu0 0.0
        %354 = vmatprep.subr.mxu0 0.0
        %355 = vmatpush1.msra.mxu0 0.0
        %356 = vmatprep.subr.mxu0 0.0
        %357 = vmatpush1.msra.mxu0 0.0
        %358 = vmatprep.subr.mxu0 0.0
        %359 = vmatpush1.msra.mxu0 0.0
        %360 = vmatprep.subr.mxu0 0.0
        %361 = vmatpush1.msra.mxu0 %v328
        %362 = vmatprep.subr.mxu0 0.0
        %363 = vmatpush2.msra.mxu0 0.0
        %364 = vmatprep.subr.mxu0 0.0
        %365 = vmatpush2.msra.mxu0 0.0
        %366 = vmatprep.subr.mxu0 0.0
        %367 = vmatpush2.msra.mxu0 0.0
        %368 = vmatprep.subr.mxu0 0.0
        %369 = vmatpush2.msra.mxu0 0.0
        %370 = vmatprep.subr.mxu0 0.0
        %371 = vmatpush2.msra.mxu0 0.0
        %372 = vmatprep.subr.mxu0 0.0
        %373 = vmatpush2.msra.mxu0 0.0
        %374 = vmatprep.subr.mxu0 0.0
        %375 = vmatpush2.msra.mxu0 0.0
        %376 = vmatprep.subr.mxu0 0.0
        %377 = vmatpush2.msra.mxu0 0.0
        %378 = vmatprep.subr.mxu0 0.0
        %379 = vmatpush2.msra.mxu0 0.0
        %380 = vmatprep.subr.mxu0 0.0
        %381 = vmatpush2.msra.mxu0 0.0
        %382 = vmatprep.subr.mxu0 0.0
        %383 = vmatpush2.msra.mxu0 0.0
        %384 = vmatprep.subr.mxu0 0.0
        %385 = vmatpush2.msra.mxu0 0.0
        %386 = vmatprep.subr.mxu0 0.0
        %387 = vmatpush2.msra.mxu0 0.0
        %388 = vmatprep.subr.mxu0 0.0
        %389 = vmatpush2.msra.mxu0 0.0
        %390 = vmatprep.subr.mxu0 0.0
        %391 = vmatpush2.msra.mxu0 0.0
        %392 = vmatprep.subr.mxu0 0.0
        %393 = vmatpush2.msra.mxu0 0.0
        %394 = vmatprep.mubr.f32.mxu0 0.0
        %395 = vmatmul.mubr.f32.gmra.mxu0 %v324
        %v396 = vpop.f32.mrf.mxu0
        %v397 = vadd.f32 0.0, %v396
        %v398 = vpop.f32.mrf.mxu0
        %399 = vdwg.mxu0
        %vm400 = vcmask 64512
        %v402 = vsel %vm400, %v318, 0
        %404 = vmatprep.subr.mxu0 0.0
        %405 = vmatpush1.msra.mxu0 0.0
        %406 = vmatprep.subr.mxu0 0.0
        %407 = vmatpush1.msra.mxu0 0.0
        %408 = vmatprep.subr.mxu0 0.0
        %409 = vmatpush1.msra.mxu0 0.0
        %410 = vmatprep.subr.mxu0 0.0
        %411 = vmatpush1.msra.mxu0 0.0
        %412 = vmatprep.subr.mxu0 0.0
        %413 = vmatpush1.msra.mxu0 0.0
        %414 = vmatprep.subr.mxu0 0.0
        %415 = vmatpush1.msra.mxu0 0.0
        %416 = vmatprep.subr.mxu0 0.0
        %417 = vmatpush1.msra.mxu0 0.0
        %418 = vmatprep.subr.mxu0 0.0
        %419 = vmatpush1.msra.mxu0 0.0
        %420 = vmatprep.subr.mxu0 0.0
        %421 = vmatpush1.msra.mxu0 0.0
        %422 = vmatprep.subr.mxu0 0.0
        %423 = vmatpush1.msra.mxu0 0.0
        %424 = vmatprep.subr.mxu0 0.0
        %425 = vmatpush1.msra.mxu0 0.0
        %426 = vmatprep.subr.mxu0 0.0
        %427 = vmatpush1.msra.mxu0 0.0
        %428 = vmatprep.subr.mxu0 0.0
        %429 = vmatpush1.msra.mxu0 0.0
        %430 = vmatprep.subr.mxu0 0.0
        %431 = vmatpush1.msra.mxu0 0.0
        %432 = vmatprep.subr.mxu0 0.0
        %433 = vmatpush1.msra.mxu0 0.0
        %434 = vmatprep.subr.mxu0 0.0
        %435 = vmatpush1.msra.mxu0 %v320
        %436 = vmatprep.subr.mxu0 0.0
        %437 = vmatpush2.msra.mxu0 0.0
        %438 = vmatprep.subr.mxu0 0.0
        %439 = vmatpush2.msra.mxu0 0.0
        %440 = vmatprep.subr.mxu0 0.0
        %441 = vmatpush2.msra.mxu0 0.0
        %442 = vmatprep.subr.mxu0 0.0
        %443 = vmatpush2.msra.mxu0 0.0
        %444 = vmatprep.subr.mxu0 0.0
        %445 = vmatpush2.msra.mxu0 0.0
        %446 = vmatprep.subr.mxu0 0.0
        %447 = vmatpush2.msra.mxu0 0.0
        %448 = vmatprep.subr.mxu0 0.0
        %449 = vmatpush2.msra.mxu0 0.0
        %450 = vmatprep.subr.mxu0 0.0
        %451 = vmatpush2.msra.mxu0 0.0
        %452 = vmatprep.subr.mxu0 0.0
        %453 = vmatpush2.msra.mxu0 0.0
        %454 = vmatprep.subr.mxu0 0.0
        %455 = vmatpush2.msra.mxu0 0.0
        %456 = vmatprep.subr.mxu0 0.0
        %457 = vmatpush2.msra.mxu0 0.0
        %458 = vmatprep.subr.mxu0 0.0
        %459 = vmatpush2.msra.mxu0 0.0
        %460 = vmatprep.subr.mxu0 0.0
        %461 = vmatpush2.msra.mxu0 0.0
        %462 = vmatprep.subr.mxu0 0.0
        %463 = vmatpush2.msra.mxu0 0.0
        %464 = vmatprep.subr.mxu0 0.0
        %465 = vmatpush2.msra.mxu0 0.0
        %466 = vmatprep.subr.mxu0 0.0
        %467 = vmatpush2.msra.mxu0 0.0
        %468 = vmatprep.mubr.f32.mxu0 0.0
        %469 = vmatmul.mubr.f32.gmra.mxu0 %v402
        %v470 = vpop.f32.mrf.mxu0
        %v471 = vadd.f32 %v397, %v470
        %v472 = vpop.f32.mrf.mxu0
        %473 = vdwg.mxu0
        %474 = vst [vmem:[#allocation2] sm:$0xff] %v471
        %s475 = scalar_lea.vmem %s273, 8 [#allocation3]
        %v476 = vld [vmem:[%s475] sm:$0xff]
        %s477 = scalar_lea.vmem %s317, 2
        %v478 = vld [vmem:[%s477] sm:$0x3]
        %v480 = vsel %vm326, %v478, 0
        %482 = vmatprep.subr.mxu0 0.0
        %483 = vmatpush1.msra.mxu0 0.0
        %484 = vmatprep.subr.mxu0 0.0
        %485 = vmatpush1.msra.mxu0 0.0
        %486 = vmatprep.subr.mxu0 0.0
        %487 = vmatpush1.msra.mxu0 0.0
        %488 = vmatprep.subr.mxu0 0.0
        %489 = vmatpush1.msra.mxu0 0.0
        %490 = vmatprep.subr.mxu0 0.0
        %491 = vmatpush1.msra.mxu0 0.0
        %492 = vmatprep.subr.mxu0 0.0
        %493 = vmatpush1.msra.mxu0 0.0
        %494 = vmatprep.subr.mxu0 0.0
        %495 = vmatpush1.msra.mxu0 0.0
        %496 = vmatprep.subr.mxu0 0.0
        %497 = vmatpush1.msra.mxu0 0.0
        %498 = vmatprep.subr.mxu0 0.0
        %499 = vmatpush1.msra.mxu0 0.0
        %500 = vmatprep.subr.mxu0 0.0
        %501 = vmatpush1.msra.mxu0 0.0
        %502 = vmatprep.subr.mxu0 0.0
        %503 = vmatpush1.msra.mxu0 0.0
        %504 = vmatprep.subr.mxu0 0.0
        %505 = vmatpush1.msra.mxu0 0.0
        %506 = vmatprep.subr.mxu0 0.0
        %507 = vmatpush1.msra.mxu0 0.0
        %508 = vmatprep.subr.mxu0 0.0
        %509 = vmatpush1.msra.mxu0 0.0
        %510 = vmatprep.subr.mxu0 0.0
        %511 = vmatpush1.msra.mxu0 0.0
        %512 = vmatprep.subr.mxu0 0.0
        %513 = vmatpush1.msra.mxu0 %v480
        %514 = vmatprep.subr.mxu0 0.0
        %515 = vmatpush2.msra.mxu0 0.0
        %516 = vmatprep.subr.mxu0 0.0
        %517 = vmatpush2.msra.mxu0 0.0
        %518 = vmatprep.subr.mxu0 0.0
        %519 = vmatpush2.msra.mxu0 0.0
        %520 = vmatprep.subr.mxu0 0.0
        %521 = vmatpush2.msra.mxu0 0.0
        %522 = vmatprep.subr.mxu0 0.0
        %523 = vmatpush2.msra.mxu0 0.0
        %524 = vmatprep.subr.mxu0 0.0
        %525 = vmatpush2.msra.mxu0 0.0
        %526 = vmatprep.subr.mxu0 0.0
        %527 = vmatpush2.msra.mxu0 0.0
        %528 = vmatprep.subr.mxu0 0.0
        %529 = vmatpush2.msra.mxu0 0.0
        %530 = vmatprep.subr.mxu0 0.0
        %531 = vmatpush2.msra.mxu0 0.0
        %532 = vmatprep.subr.mxu0 0.0
        %533 = vmatpush2.msra.mxu0 0.0
        %534 = vmatprep.subr.mxu0 0.0
        %535 = vmatpush2.msra.mxu0 0.0
        %536 = vmatprep.subr.mxu0 0.0
        %537 = vmatpush2.msra.mxu0 0.0
        %538 = vmatprep.subr.mxu0 0.0
        %539 = vmatpush2.msra.mxu0 0.0
        %540 = vmatprep.subr.mxu0 0.0
        %541 = vmatpush2.msra.mxu0 0.0
        %542 = vmatprep.subr.mxu0 0.0
        %543 = vmatpush2.msra.mxu0 0.0
        %544 = vmatprep.subr.mxu0 0.0
        %545 = vmatpush2.msra.mxu0 0.0
        %546 = vmatprep.mubr.f32.mxu0 0.0
        %547 = vmatmul.mubr.f32.gmra.mxu0 %v324
        %v548 = vpop.f32.mrf.mxu0
        %v549 = vadd.f32 0.0, %v548
        %v550 = vpop.f32.mrf.mxu0
        %551 = vdwg.mxu0
        %552 = vmatprep.subr.mxu0 0.0
        %553 = vmatpush1.msra.mxu0 0.0
        %554 = vmatprep.subr.mxu0 0.0
        %555 = vmatpush1.msra.mxu0 0.0
        %556 = vmatprep.subr.mxu0 0.0
        %557 = vmatpush1.msra.mxu0 0.0
        %558 = vmatprep.subr.mxu0 0.0
        %559 = vmatpush1.msra.mxu0 0.0
        %560 = vmatprep.subr.mxu0 0.0
        %561 = vmatpush1.msra.mxu0 0.0
        %562 = vmatprep.subr.mxu0 0.0
        %563 = vmatpush1.msra.mxu0 0.0
        %564 = vmatprep.subr.mxu0 0.0
        %565 = vmatpush1.msra.mxu0 0.0
        %566 = vmatprep.subr.mxu0 0.0
        %567 = vmatpush1.msra.mxu0 0.0
        %568 = vmatprep.subr.mxu0 0.0
        %569 = vmatpush1.msra.mxu0 0.0
        %570 = vmatprep.subr.mxu0 0.0
        %571 = vmatpush1.msra.mxu0 0.0
        %572 = vmatprep.subr.mxu0 0.0
        %573 = vmatpush1.msra.mxu0 0.0
        %574 = vmatprep.subr.mxu0 0.0
        %575 = vmatpush1.msra.mxu0 0.0
        %576 = vmatprep.subr.mxu0 0.0
        %577 = vmatpush1.msra.mxu0 0.0
        %578 = vmatprep.subr.mxu0 0.0
        %579 = vmatpush1.msra.mxu0 0.0
        %580 = vmatprep.subr.mxu0 0.0
        %581 = vmatpush1.msra.mxu0 0.0
        %582 = vmatprep.subr.mxu0 0.0
        %583 = vmatpush1.msra.mxu0 %v476
        %584 = vmatprep.subr.mxu0 0.0
        %585 = vmatpush2.msra.mxu0 0.0
        %586 = vmatprep.subr.mxu0 0.0
        %587 = vmatpush2.msra.mxu0 0.0
        %588 = vmatprep.subr.mxu0 0.0
        %589 = vmatpush2.msra.mxu0 0.0
        %590 = vmatprep.subr.mxu0 0.0
        %591 = vmatpush2.msra.mxu0 0.0
        %592 = vmatprep.subr.mxu0 0.0
        %593 = vmatpush2.msra.mxu0 0.0
        %594 = vmatprep.subr.mxu0 0.0
        %595 = vmatpush2.msra.mxu0 0.0
        %596 = vmatprep.subr.mxu0 0.0
        %597 = vmatpush2.msra.mxu0 0.0
        %598 = vmatprep.subr.mxu0 0.0
        %599 = vmatpush2.msra.mxu0 0.0
        %600 = vmatprep.subr.mxu0 0.0
        %601 = vmatpush2.msra.mxu0 0.0
        %602 = vmatprep.subr.mxu0 0.0
        %603 = vmatpush2.msra.mxu0 0.0
        %604 = vmatprep.subr.mxu0 0.0
        %605 = vmatpush2.msra.mxu0 0.0
        %606 = vmatprep.subr.mxu0 0.0
        %607 = vmatpush2.msra.mxu0 0.0
        %608 = vmatprep.subr.mxu0 0.0
        %609 = vmatpush2.msra.mxu0 0.0
        %610 = vmatprep.subr.mxu0 0.0
        %611 = vmatpush2.msra.mxu0 0.0
        %612 = vmatprep.subr.mxu0 0.0
        %613 = vmatpush2.msra.mxu0 0.0
        %614 = vmatprep.subr.mxu0 0.0
        %615 = vmatpush2.msra.mxu0 0.0
        %616 = vmatprep.mubr.f32.mxu0 0.0
        %617 = vmatmul.mubr.f32.gmra.mxu0 %v402
        %v618 = vpop.f32.mrf.mxu0
        %v619 = vadd.f32 %v549, %v618
        %v620 = vpop.f32.mrf.mxu0
        %621 = vdwg.mxu0
        %s622 = scalar_lea.vmem [#allocation2], 8
        %623 = vst [vmem:[%s622] sm:$0xff] %v619
        %v624 = vmax.f32 %v471, %v619
        %s625 = scalar_lea.vmem %s273, 16 [#allocation3]
        %v626 = vld [vmem:[%s625] sm:$0xff]
        %s627 = scalar_lea.vmem %s317, 4
        %v628 = vld [vmem:[%s627] sm:$0x3]
        %v630 = vsel %vm326, %v628, 0
        %632 = vmatprep.subr.mxu0 0.0
        %633 = vmatpush1.msra.mxu0 0.0
        %634 = vmatprep.subr.mxu0 0.0
        %635 = vmatpush1.msra.mxu0 0.0
        %636 = vmatprep.subr.mxu0 0.0
        %637 = vmatpush1.msra.mxu0 0.0
        %638 = vmatprep.subr.mxu0 0.0
        %639 = vmatpush1.msra.mxu0 0.0
        %640 = vmatprep.subr.mxu0 0.0
        %641 = vmatpush1.msra.mxu0 0.0
        %642 = vmatprep.subr.mxu0 0.0
        %643 = vmatpush1.msra.mxu0 0.0
        %644 = vmatprep.subr.mxu0 0.0
        %645 = vmatpush1.msra.mxu0 0.0
        %646 = vmatprep.subr.mxu0 0.0
        %647 = vmatpush1.msra.mxu0 0.0
        %648 = vmatprep.subr.mxu0 0.0
        %649 = vmatpush1.msra.mxu0 0.0
        %650 = vmatprep.subr.mxu0 0.0
        %651 = vmatpush1.msra.mxu0 0.0
        %652 = vmatprep.subr.mxu0 0.0
        %653 = vmatpush1.msra.mxu0 0.0
        %654 = vmatprep.subr.mxu0 0.0
        %655 = vmatpush1.msra.mxu0 0.0
        %656 = vmatprep.subr.mxu0 0.0
        %657 = vmatpush1.msra.mxu0 0.0
        %658 = vmatprep.subr.mxu0 0.0
        %659 = vmatpush1.msra.mxu0 0.0
        %660 = vmatprep.subr.mxu0 0.0
        %661 = vmatpush1.msra.mxu0 0.0
        %662 = vmatprep.subr.mxu0 0.0
        %663 = vmatpush1.msra.mxu0 %v630
        %664 = vmatprep.subr.mxu0 0.0
        %665 = vmatpush2.msra.mxu0 0.0
        %666 = vmatprep.subr.mxu0 0.0
        %667 = vmatpush2.msra.mxu0 0.0
        %668 = vmatprep.subr.mxu0 0.0
        %669 = vmatpush2.msra.mxu0 0.0
        %670 = vmatprep.subr.mxu0 0.0
        %671 = vmatpush2.msra.mxu0 0.0
        %672 = vmatprep.subr.mxu0 0.0
        %673 = vmatpush2.msra.mxu0 0.0
        %674 = vmatprep.subr.mxu0 0.0
        %675 = vmatpush2.msra.mxu0 0.0
        %676 = vmatprep.subr.mxu0 0.0
        %677 = vmatpush2.msra.mxu0 0.0
        %678 = vmatprep.subr.mxu0 0.0
        %679 = vmatpush2.msra.mxu0 0.0
        %680 = vmatprep.subr.mxu0 0.0
        %681 = vmatpush2.msra.mxu0 0.0
        %682 = vmatprep.subr.mxu0 0.0
        %683 = vmatpush2.msra.mxu0 0.0
        %684 = vmatprep.subr.mxu0 0.0
        %685 = vmatpush2.msra.mxu0 0.0
        %686 = vmatprep.subr.mxu0 0.0
        %687 = vmatpush2.msra.mxu0 0.0
        %688 = vmatprep.subr.mxu0 0.0
        %689 = vmatpush2.msra.mxu0 0.0
        %690 = vmatprep.subr.mxu0 0.0
        %691 = vmatpush2.msra.mxu0 0.0
        %692 = vmatprep.subr.mxu0 0.0
        %693 = vmatpush2.msra.mxu0 0.0
        %694 = vmatprep.subr.mxu0 0.0
        %695 = vmatpush2.msra.mxu0 0.0
        %696 = vmatprep.mubr.f32.mxu0 0.0
        %697 = vmatmul.mubr.f32.gmra.mxu0 %v324
        %v698 = vpop.f32.mrf.mxu0
        %v699 = vadd.f32 0.0, %v698
        %v700 = vpop.f32.mrf.mxu0
        %701 = vdwg.mxu0
        %702 = vmatprep.subr.mxu0 0.0
        %703 = vmatpush1.msra.mxu0 0.0
        %704 = vmatprep.subr.mxu0 0.0
        %705 = vmatpush1.msra.mxu0 0.0
        %706 = vmatprep.subr.mxu0 0.0
        %707 = vmatpush1.msra.mxu0 0.0
        %708 = vmatprep.subr.mxu0 0.0
        %709 = vmatpush1.msra.mxu0 0.0
        %710 = vmatprep.subr.mxu0 0.0
        %711 = vmatpush1.msra.mxu0 0.0
        %712 = vmatprep.subr.mxu0 0.0
        %713 = vmatpush1.msra.mxu0 0.0
        %714 = vmatprep.subr.mxu0 0.0
        %715 = vmatpush1.msra.mxu0 0.0
        %716 = vmatprep.subr.mxu0 0.0
        %717 = vmatpush1.msra.mxu0 0.0
        %718 = vmatprep.subr.mxu0 0.0
        %719 = vmatpush1.msra.mxu0 0.0
        %720 = vmatprep.subr.mxu0 0.0
        %721 = vmatpush1.msra.mxu0 0.0
        %722 = vmatprep.subr.mxu0 0.0
        %723 = vmatpush1.msra.mxu0 0.0
        %724 = vmatprep.subr.mxu0 0.0
        %725 = vmatpush1.msra.mxu0 0.0
        %726 = vmatprep.subr.mxu0 0.0
        %727 = vmatpush1.msra.mxu0 0.0
        %728 = vmatprep.subr.mxu0 0.0
        %729 = vmatpush1.msra.mxu0 0.0
        %730 = vmatprep.subr.mxu0 0.0
        %731 = vmatpush1.msra.mxu0 0.0
        %732 = vmatprep.subr.mxu0 0.0
        %733 = vmatpush1.msra.mxu0 %v626
        %734 = vmatprep.subr.mxu0 0.0
        %735 = vmatpush2.msra.mxu0 0.0
        %736 = vmatprep.subr.mxu0 0.0
        %737 = vmatpush2.msra.mxu0 0.0
        %738 = vmatprep.subr.mxu0 0.0
        %739 = vmatpush2.msra.mxu0 0.0
        %740 = vmatprep.subr.mxu0 0.0
        %741 = vmatpush2.msra.mxu0 0.0
        %742 = vmatprep.subr.mxu0 0.0
        %743 = vmatpush2.msra.mxu0 0.0
        %744 = vmatprep.subr.mxu0 0.0
        %745 = vmatpush2.msra.mxu0 0.0
        %746 = vmatprep.subr.mxu0 0.0
        %747 = vmatpush2.msra.mxu0 0.0
        %748 = vmatprep.subr.mxu0 0.0
        %749 = vmatpush2.msra.mxu0 0.0
        %750 = vmatprep.subr.mxu0 0.0
        %751 = vmatpush2.msra.mxu0 0.0
        %752 = vmatprep.subr.mxu0 0.0
        %753 = vmatpush2.msra.mxu0 0.0
        %754 = vmatprep.subr.mxu0 0.0
        %755 = vmatpush2.msra.mxu0 0.0
        %756 = vmatprep.subr.mxu0 0.0
        %757 = vmatpush2.msra.mxu0 0.0
        %758 = vmatprep.subr.mxu0 0.0
        %759 = vmatpush2.msra.mxu0 0.0
        %760 = vmatprep.subr.mxu0 0.0
        %761 = vmatpush2.msra.mxu0 0.0
        %762 = vmatprep.subr.mxu0 0.0
        %763 = vmatpush2.msra.mxu0 0.0
        %764 = vmatprep.subr.mxu0 0.0
        %765 = vmatpush2.msra.mxu0 0.0
        %766 = vmatprep.mubr.f32.mxu0 0.0
        %767 = vmatmul.mubr.f32.gmra.mxu0 %v402
        %v768 = vpop.f32.mrf.mxu0
        %v769 = vadd.f32 %v699, %v768
        %v770 = vpop.f32.mrf.mxu0
        %771 = vdwg.mxu0
        %s772 = scalar_lea.vmem [#allocation2], 16
        %773 = vst [vmem:[%s772] sm:$0xff] %v769
        %v774 = vmax.f32 %v624, %v769
        %s775 = scalar_lea.vmem %s273, 24 [#allocation3]
        %v776 = vld [vmem:[%s775] sm:$0xff]
        %s777 = scalar_lea.vmem %s317, 6
        %v778 = vld [vmem:[%s777] sm:$0x3]
        %v780 = vsel %vm326, %v778, 0
        %782 = vmatprep.subr.mxu0 0.0
        %783 = vmatpush1.msra.mxu0 0.0
        %784 = vmatprep.subr.mxu0 0.0
        %785 = vmatpush1.msra.mxu0 0.0
        %786 = vmatprep.subr.mxu0 0.0
        %787 = vmatpush1.msra.mxu0 0.0
        %788 = vmatprep.subr.mxu0 0.0
        %789 = vmatpush1.msra.mxu0 0.0
        %790 = vmatprep.subr.mxu0 0.0
        %791 = vmatpush1.msra.mxu0 0.0
        %792 = vmatprep.subr.mxu0 0.0
        %793 = vmatpush1.msra.mxu0 0.0
        %794 = vmatprep.subr.mxu0 0.0
        %795 = vmatpush1.msra.mxu0 0.0
        %796 = vmatprep.subr.mxu0 0.0
        %797 = vmatpush1.msra.mxu0 0.0
        %798 = vmatprep.subr.mxu0 0.0
        %799 = vmatpush1.msra.mxu0 0.0
        %800 = vmatprep.subr.mxu0 0.0
        %801 = vmatpush1.msra.mxu0 0.0
        %802 = vmatprep.subr.mxu0 0.0
        %803 = vmatpush1.msra.mxu0 0.0
        %804 = vmatprep.subr.mxu0 0.0
        %805 = vmatpush1.msra.mxu0 0.0
        %806 = vmatprep.subr.mxu0 0.0
        %807 = vmatpush1.msra.mxu0 0.0
        %808 = vmatprep.subr.mxu0 0.0
        %809 = vmatpush1.msra.mxu0 0.0
        %810 = vmatprep.subr.mxu0 0.0
        %811 = vmatpush1.msra.mxu0 0.0
        %812 = vmatprep.subr.mxu0 0.0
        %813 = vmatpush1.msra.mxu0 %v780
        %814 = vmatprep.subr.mxu0 0.0
        %815 = vmatpush2.msra.mxu0 0.0
        %816 = vmatprep.subr.mxu0 0.0
        %817 = vmatpush2.msra.mxu0 0.0
        %818 = vmatprep.subr.mxu0 0.0
        %819 = vmatpush2.msra.mxu0 0.0
        %820 = vmatprep.subr.mxu0 0.0
        %821 = vmatpush2.msra.mxu0 0.0
        %822 = vmatprep.subr.mxu0 0.0
        %823 = vmatpush2.msra.mxu0 0.0
        %824 = vmatprep.subr.mxu0 0.0
        %825 = vmatpush2.msra.mxu0 0.0
        %826 = vmatprep.subr.mxu0 0.0
        %827 = vmatpush2.msra.mxu0 0.0
        %828 = vmatprep.subr.mxu0 0.0
        %829 = vmatpush2.msra.mxu0 0.0
        %830 = vmatprep.subr.mxu0 0.0
        %831 = vmatpush2.msra.mxu0 0.0
        %832 = vmatprep.subr.mxu0 0.0
        %833 = vmatpush2.msra.mxu0 0.0
        %834 = vmatprep.subr.mxu0 0.0
        %835 = vmatpush2.msra.mxu0 0.0
        %836 = vmatprep.subr.mxu0 0.0
        %837 = vmatpush2.msra.mxu0 0.0
        %838 = vmatprep.subr.mxu0 0.0
        %839 = vmatpush2.msra.mxu0 0.0
        %840 = vmatprep.subr.mxu0 0.0
        %841 = vmatpush2.msra.mxu0 0.0
        %842 = vmatprep.subr.mxu0 0.0
        %843 = vmatpush2.msra.mxu0 0.0
        %844 = vmatprep.subr.mxu0 0.0
        %845 = vmatpush2.msra.mxu0 0.0
        %846 = vmatprep.mubr.f32.mxu0 0.0
        %847 = vmatmul.mubr.f32.gmra.mxu0 %v324
        %v848 = vpop.f32.mrf.mxu0
        %v849 = vadd.f32 0.0, %v848
        %v850 = vpop.f32.mrf.mxu0
        %851 = vdwg.mxu0
        %852 = vmatprep.subr.mxu0 0.0
        %853 = vmatpush1.msra.mxu0 0.0
        %854 = vmatprep.subr.mxu0 0.0
        %855 = vmatpush1.msra.mxu0 0.0
        %856 = vmatprep.subr.mxu0 0.0
        %857 = vmatpush1.msra.mxu0 0.0
        %858 = vmatprep.subr.mxu0 0.0
        %859 = vmatpush1.msra.mxu0 0.0
        %860 = vmatprep.subr.mxu0 0.0
        %861 = vmatpush1.msra.mxu0 0.0
        %862 = vmatprep.subr.mxu0 0.0
        %863 = vmatpush1.msra.mxu0 0.0
        %864 = vmatprep.subr.mxu0 0.0
        %865 = vmatpush1.msra.mxu0 0.0
        %866 = vmatprep.subr.mxu0 0.0
        %867 = vmatpush1.msra.mxu0 0.0
        %868 = vmatprep.subr.mxu0 0.0
        %869 = vmatpush1.msra.mxu0 0.0
        %870 = vmatprep.subr.mxu0 0.0
        %871 = vmatpush1.msra.mxu0 0.0
        %872 = vmatprep.subr.mxu0 0.0
        %873 = vmatpush1.msra.mxu0 0.0
        %874 = vmatprep.subr.mxu0 0.0
        %875 = vmatpush1.msra.mxu0 0.0
        %876 = vmatprep.subr.mxu0 0.0
        %877 = vmatpush1.msra.mxu0 0.0
        %878 = vmatprep.subr.mxu0 0.0
        %879 = vmatpush1.msra.mxu0 0.0
        %880 = vmatprep.subr.mxu0 0.0
        %881 = vmatpush1.msra.mxu0 0.0
        %882 = vmatprep.subr.mxu0 0.0
        %883 = vmatpush1.msra.mxu0 %v776
        %884 = vmatprep.subr.mxu0 0.0
        %885 = vmatpush2.msra.mxu0 0.0
        %886 = vmatprep.subr.mxu0 0.0
        %887 = vmatpush2.msra.mxu0 0.0
        %888 = vmatprep.subr.mxu0 0.0
        %889 = vmatpush2.msra.mxu0 0.0
        %890 = vmatprep.subr.mxu0 0.0
        %891 = vmatpush2.msra.mxu0 0.0
        %892 = vmatprep.subr.mxu0 0.0
        %893 = vmatpush2.msra.mxu0 0.0
        %894 = vmatprep.subr.mxu0 0.0
        %895 = vmatpush2.msra.mxu0 0.0
        %896 = vmatprep.subr.mxu0 0.0
        %897 = vmatpush2.msra.mxu0 0.0
        %898 = vmatprep.subr.mxu0 0.0
        %899 = vmatpush2.msra.mxu0 0.0
        %900 = vmatprep.subr.mxu0 0.0
        %901 = vmatpush2.msra.mxu0 0.0
        %902 = vmatprep.subr.mxu0 0.0
        %903 = vmatpush2.msra.mxu0 0.0
        %904 = vmatprep.subr.mxu0 0.0
        %905 = vmatpush2.msra.mxu0 0.0
        %906 = vmatprep.subr.mxu0 0.0
        %907 = vmatpush2.msra.mxu0 0.0
        %908 = vmatprep.subr.mxu0 0.0
        %909 = vmatpush2.msra.mxu0 0.0
        %910 = vmatprep.subr.mxu0 0.0
        %911 = vmatpush2.msra.mxu0 0.0
        %912 = vmatprep.subr.mxu0 0.0
        %913 = vmatpush2.msra.mxu0 0.0
        %914 = vmatprep.subr.mxu0 0.0
        %915 = vmatpush2.msra.mxu0 0.0
        %916 = vmatprep.mubr.f32.mxu0 0.0
        %917 = vmatmul.mubr.f32.gmra.mxu0 %v402
        %v918 = vpop.f32.mrf.mxu0
        %v919 = vadd.f32 %v849, %v918
        %v920 = vpop.f32.mrf.mxu0
        %921 = vdwg.mxu0
        %s922 = scalar_lea.vmem [#allocation2], 24
        %923 = vst [vmem:[%s922] sm:$0xff] %v919
        %v924 = vmax.f32 %v774, %v919
        %s925 = scalar_lea.vmem %s273, 32 [#allocation3]
        %v926 = vld [vmem:[%s925] sm:$0xff]
        %s927 = scalar_lea.vmem %s317, 8
        %v928 = vld [vmem:[%s927] sm:$0x3]
        %v930 = vsel %vm326, %v928, 0
        %932 = vmatprep.subr.mxu0 0.0
        %933 = vmatpush1.msra.mxu0 0.0
        %934 = vmatprep.subr.mxu0 0.0
        %935 = vmatpush1.msra.mxu0 0.0
        %936 = vmatprep.subr.mxu0 0.0
        %937 = vmatpush1.msra.mxu0 0.0
        %938 = vmatprep.subr.mxu0 0.0
        %939 = vmatpush1.msra.mxu0 0.0
        %940 = vmatprep.subr.mxu0 0.0
        %941 = vmatpush1.msra.mxu0 0.0
        %942 = vmatprep.subr.mxu0 0.0
        %943 = vmatpush1.msra.mxu0 0.0
        %944 = vmatprep.subr.mxu0 0.0
        %945 = vmatpush1.msra.mxu0 0.0
        %946 = vmatprep.subr.mxu0 0.0
        %947 = vmatpush1.msra.mxu0 0.0
        %948 = vmatprep.subr.mxu0 0.0
        %949 = vmatpush1.msra.mxu0 0.0
        %950 = vmatprep.subr.mxu0 0.0
        %951 = vmatpush1.msra.mxu0 0.0
        %952 = vmatprep.subr.mxu0 0.0
        %953 = vmatpush1.msra.mxu0 0.0
        %954 = vmatprep.subr.mxu0 0.0
        %955 = vmatpush1.msra.mxu0 0.0
        %956 = vmatprep.subr.mxu0 0.0
        %957 = vmatpush1.msra.mxu0 0.0
        %958 = vmatprep.subr.mxu0 0.0
        %959 = vmatpush1.msra.mxu0 0.0
        %960 = vmatprep.subr.mxu0 0.0
        %961 = vmatpush1.msra.mxu0 0.0
        %962 = vmatprep.subr.mxu0 0.0
        %963 = vmatpush1.msra.mxu0 %v930
        %964 = vmatprep.subr.mxu0 0.0
        %965 = vmatpush2.msra.mxu0 0.0
        %966 = vmatprep.subr.mxu0 0.0
        %967 = vmatpush2.msra.mxu0 0.0
        %968 = vmatprep.subr.mxu0 0.0
        %969 = vmatpush2.msra.mxu0 0.0
        %970 = vmatprep.subr.mxu0 0.0
        %971 = vmatpush2.msra.mxu0 0.0
        %972 = vmatprep.subr.mxu0 0.0
        %973 = vmatpush2.msra.mxu0 0.0
        %974 = vmatprep.subr.mxu0 0.0
        %975 = vmatpush2.msra.mxu0 0.0
        %976 = vmatprep.subr.mxu0 0.0
        %977 = vmatpush2.msra.mxu0 0.0
        %978 = vmatprep.subr.mxu0 0.0
        %979 = vmatpush2.msra.mxu0 0.0
        %980 = vmatprep.subr.mxu0 0.0
        %981 = vmatpush2.msra.mxu0 0.0
        %982 = vmatprep.subr.mxu0 0.0
        %983 = vmatpush2.msra.mxu0 0.0
        %984 = vmatprep.subr.mxu0 0.0
        %985 = vmatpush2.msra.mxu0 0.0
        %986 = vmatprep.subr.mxu0 0.0
        %987 = vmatpush2.msra.mxu0 0.0
        %988 = vmatprep.subr.mxu0 0.0
        %989 = vmatpush2.msra.mxu0 0.0
        %990 = vmatprep.subr.mxu0 0.0
        %991 = vmatpush2.msra.mxu0 0.0
        %992 = vmatprep.subr.mxu0 0.0
        %993 = vmatpush2.msra.mxu0 0.0
        %994 = vmatprep.subr.mxu0 0.0
        %995 = vmatpush2.msra.mxu0 0.0
        %996 = vmatprep.mubr.f32.mxu0 0.0
        %997 = vmatmul.mubr.f32.gmra.mxu0 %v324
        %v998 = vpop.f32.mrf.mxu0
        %v999 = vadd.f32 0.0, %v998
        %v1000 = vpop.f32.mrf.mxu0
        %1001 = vdwg.mxu0
        %1002 = vmatprep.subr.mxu0 0.0
        %1003 = vmatpush1.msra.mxu0 0.0
        %1004 = vmatprep.subr.mxu0 0.0
        %1005 = vmatpush1.msra.mxu0 0.0
        %1006 = vmatprep.subr.mxu0 0.0
        %1007 = vmatpush1.msra.mxu0 0.0
        %1008 = vmatprep.subr.mxu0 0.0
        %1009 = vmatpush1.msra.mxu0 0.0
        %1010 = vmatprep.subr.mxu0 0.0
        %1011 = vmatpush1.msra.mxu0 0.0
        %1012 = vmatprep.subr.mxu0 0.0
        %1013 = vmatpush1.msra.mxu0 0.0
        %1014 = vmatprep.subr.mxu0 0.0
        %1015 = vmatpush1.msra.mxu0 0.0
        %1016 = vmatprep.subr.mxu0 0.0
        %1017 = vmatpush1.msra.mxu0 0.0
        %1018 = vmatprep.subr.mxu0 0.0
        %1019 = vmatpush1.msra.mxu0 0.0
        %1020 = vmatprep.subr.mxu0 0.0
        %1021 = vmatpush1.msra.mxu0 0.0
        %1022 = vmatprep.subr.mxu0 0.0
        %1023 = vmatpush1.msra.mxu0 0.0
        %1024 = vmatprep.subr.mxu0 0.0
        %1025 = vmatpush1.msra.mxu0 0.0
        %1026 = vmatprep.subr.mxu0 0.0
        %1027 = vmatpush1.msra.mxu0 0.0
        %1028 = vmatprep.subr.mxu0 0.0
        %1029 = vmatpush1.msra.mxu0 0.0
        %1030 = vmatprep.subr.mxu0 0.0
        %1031 = vmatpush1.msra.mxu0 0.0
        %1032 = vmatprep.subr.mxu0 0.0
        %1033 = vmatpush1.msra.mxu0 %v926
        %1034 = vmatprep.subr.mxu0 0.0
        %1035 = vmatpush2.msra.mxu0 0.0
        %1036 = vmatprep.subr.mxu0 0.0
        %1037 = vmatpush2.msra.mxu0 0.0
        %1038 = vmatprep.subr.mxu0 0.0
        %1039 = vmatpush2.msra.mxu0 0.0
        %1040 = vmatprep.subr.mxu0 0.0
        %1041 = vmatpush2.msra.mxu0 0.0
        %1042 = vmatprep.subr.mxu0 0.0
        %1043 = vmatpush2.msra.mxu0 0.0
        %1044 = vmatprep.subr.mxu0 0.0
        %1045 = vmatpush2.msra.mxu0 0.0
        %1046 = vmatprep.subr.mxu0 0.0
        %1047 = vmatpush2.msra.mxu0 0.0
        %1048 = vmatprep.subr.mxu0 0.0
        %1049 = vmatpush2.msra.mxu0 0.0
        %1050 = vmatprep.subr.mxu0 0.0
        %1051 = vmatpush2.msra.mxu0 0.0
        %1052 = vmatprep.subr.mxu0 0.0
        %1053 = vmatpush2.msra.mxu0 0.0
        %1054 = vmatprep.subr.mxu0 0.0
        %1055 = vmatpush2.msra.mxu0 0.0
        %1056 = vmatprep.subr.mxu0 0.0
        %1057 = vmatpush2.msra.mxu0 0.0
        %1058 = vmatprep.subr.mxu0 0.0
        %1059 = vmatpush2.msra.mxu0 0.0
        %1060 = vmatprep.subr.mxu0 0.0
        %1061 = vmatpush2.msra.mxu0 0.0
        %1062 = vmatprep.subr.mxu0 0.0
        %1063 = vmatpush2.msra.mxu0 0.0
        %1064 = vmatprep.subr.mxu0 0.0
        %1065 = vmatpush2.msra.mxu0 0.0
        %1066 = vmatprep.mubr.f32.mxu0 0.0
        %1067 = vmatmul.mubr.f32.gmra.mxu0 %v402
        %v1068 = vpop.f32.mrf.mxu0
        %v1069 = vadd.f32 %v999, %v1068
        %v1070 = vpop.f32.mrf.mxu0
        %1071 = vdwg.mxu0
        %s1072 = scalar_lea.vmem [#allocation2], 32
        %1073 = vst [vmem:[%s1072] sm:$0xff] %v1069
        %v1074 = vmax.f32 %v924, %v1069
        %s1075 = scalar_lea.vmem %s273, 40 [#allocation3]
        %v1076 = vld [vmem:[%s1075] sm:$0xff]
        %s1077 = scalar_lea.vmem %s317, 10
        %v1078 = vld [vmem:[%s1077] sm:$0x3]
        %v1080 = vsel %vm326, %v1078, 0
        %1082 = vmatprep.subr.mxu0 0.0
        %1083 = vmatpush1.msra.mxu0 0.0
        %1084 = vmatprep.subr.mxu0 0.0
        %1085 = vmatpush1.msra.mxu0 0.0
        %1086 = vmatprep.subr.mxu0 0.0
        %1087 = vmatpush1.msra.mxu0 0.0
        %1088 = vmatprep.subr.mxu0 0.0
        %1089 = vmatpush1.msra.mxu0 0.0
        %1090 = vmatprep.subr.mxu0 0.0
        %1091 = vmatpush1.msra.mxu0 0.0
        %1092 = vmatprep.subr.mxu0 0.0
        %1093 = vmatpush1.msra.mxu0 0.0
        %1094 = vmatprep.subr.mxu0 0.0
        %1095 = vmatpush1.msra.mxu0 0.0
        %1096 = vmatprep.subr.mxu0 0.0
        %1097 = vmatpush1.msra.mxu0 0.0
        %1098 = vmatprep.subr.mxu0 0.0
        %1099 = vmatpush1.msra.mxu0 0.0
        %1100 = vmatprep.subr.mxu0 0.0
        %1101 = vmatpush1.msra.mxu0 0.0
        %1102 = vmatprep.subr.mxu0 0.0
        %1103 = vmatpush1.msra.mxu0 0.0
        %1104 = vmatprep.subr.mxu0 0.0
        %1105 = vmatpush1.msra.mxu0 0.0
        %1106 = vmatprep.subr.mxu0 0.0
        %1107 = vmatpush1.msra.mxu0 0.0
        %1108 = vmatprep.subr.mxu0 0.0
        %1109 = vmatpush1.msra.mxu0 0.0
        %1110 = vmatprep.subr.mxu0 0.0
        %1111 = vmatpush1.msra.mxu0 0.0
        %1112 = vmatprep.subr.mxu0 0.0
        %1113 = vmatpush1.msra.mxu0 %v1080
        %1114 = vmatprep.subr.mxu0 0.0
        %1115 = vmatpush2.msra.mxu0 0.0
        %1116 = vmatprep.subr.mxu0 0.0
        %1117 = vmatpush2.msra.mxu0 0.0
        %1118 = vmatprep.subr.mxu0 0.0
        %1119 = vmatpush2.msra.mxu0 0.0
        %1120 = vmatprep.subr.mxu0 0.0
        %1121 = vmatpush2.msra.mxu0 0.0
        %1122 = vmatprep.subr.mxu0 0.0
        %1123 = vmatpush2.msra.mxu0 0.0
        %1124 = vmatprep.subr.mxu0 0.0
        %1125 = vmatpush2.msra.mxu0 0.0
        %1126 = vmatprep.subr.mxu0 0.0
        %1127 = vmatpush2.msra.mxu0 0.0
        %1128 = vmatprep.subr.mxu0 0.0
        %1129 = vmatpush2.msra.mxu0 0.0
        %1130 = vmatprep.subr.mxu0 0.0
        %1131 = vmatpush2.msra.mxu0 0.0
        %1132 = vmatprep.subr.mxu0 0.0
        %1133 = vmatpush2.msra.mxu0 0.0
        %1134 = vmatprep.subr.mxu0 0.0
        %1135 = vmatpush2.msra.mxu0 0.0
        %1136 = vmatprep.subr.mxu0 0.0
        %1137 = vmatpush2.msra.mxu0 0.0
        %1138 = vmatprep.subr.mxu0 0.0
        %1139 = vmatpush2.msra.mxu0 0.0
        %1140 = vmatprep.subr.mxu0 0.0
        %1141 = vmatpush2.msra.mxu0 0.0
        %1142 = vmatprep.subr.mxu0 0.0
        %1143 = vmatpush2.msra.mxu0 0.0
        %1144 = vmatprep.subr.mxu0 0.0
        %1145 = vmatpush2.msra.mxu0 0.0
        %1146 = vmatprep.mubr.f32.mxu0 0.0
        %1147 = vmatmul.mubr.f32.gmra.mxu0 %v324
        %v1148 = vpop.f32.mrf.mxu0
        %v1149 = vadd.f32 0.0, %v1148
        %v1150 = vpop.f32.mrf.mxu0
        %1151 = vdwg.mxu0
        %1152 = vmatprep.subr.mxu0 0.0
        %1153 = vmatpush1.msra.mxu0 0.0
        %1154 = vmatprep.subr.mxu0 0.0
        %1155 = vmatpush1.msra.mxu0 0.0
        %1156 = vmatprep.subr.mxu0 0.0
        %1157 = vmatpush1.msra.mxu0 0.0
        %1158 = vmatprep.subr.mxu0 0.0
        %1159 = vmatpush1.msra.mxu0 0.0
        %1160 = vmatprep.subr.mxu0 0.0
        %1161 = vmatpush1.msra.mxu0 0.0
        %1162 = vmatprep.subr.mxu0 0.0
        %1163 = vmatpush1.msra.mxu0 0.0
        %1164 = vmatprep.subr.mxu0 0.0
        %1165 = vmatpush1.msra.mxu0 0.0
        %1166 = vmatprep.subr.mxu0 0.0
        %1167 = vmatpush1.msra.mxu0 0.0
        %1168 = vmatprep.subr.mxu0 0.0
        %1169 = vmatpush1.msra.mxu0 0.0
        %1170 = vmatprep.subr.mxu0 0.0
        %1171 = vmatpush1.msra.mxu0 0.0
        %1172 = vmatprep.subr.mxu0 0.0
        %1173 = vmatpush1.msra.mxu0 0.0
        %1174 = vmatprep.subr.mxu0 0.0
        %1175 = vmatpush1.msra.mxu0 0.0
        %1176 = vmatprep.subr.mxu0 0.0
        %1177 = vmatpush1.msra.mxu0 0.0
        %1178 = vmatprep.subr.mxu0 0.0
        %1179 = vmatpush1.msra.mxu0 0.0
        %1180 = vmatprep.subr.mxu0 0.0
        %1181 = vmatpush1.msra.mxu0 0.0
        %1182 = vmatprep.subr.mxu0 0.0
        %1183 = vmatpush1.msra.mxu0 %v1076
        %1184 = vmatprep.subr.mxu0 0.0
        %1185 = vmatpush2.msra.mxu0 0.0
        %1186 = vmatprep.subr.mxu0 0.0
        %1187 = vmatpush2.msra.mxu0 0.0
        %1188 = vmatprep.subr.mxu0 0.0
        %1189 = vmatpush2.msra.mxu0 0.0
        %1190 = vmatprep.subr.mxu0 0.0
        %1191 = vmatpush2.msra.mxu0 0.0
        %1192 = vmatprep.subr.mxu0 0.0
        %1193 = vmatpush2.msra.mxu0 0.0
        %1194 = vmatprep.subr.mxu0 0.0
        %1195 = vmatpush2.msra.mxu0 0.0
        %1196 = vmatprep.subr.mxu0 0.0
        %1197 = vmatpush2.msra.mxu0 0.0
        %1198 = vmatprep.subr.mxu0 0.0
        %1199 = vmatpush2.msra.mxu0 0.0
        %1200 = vmatprep.subr.mxu0 0.0
        %1201 = vmatpush2.msra.mxu0 0.0
        %1202 = vmatprep.subr.mxu0 0.0
        %1203 = vmatpush2.msra.mxu0 0.0
        %1204 = vmatprep.subr.mxu0 0.0
        %1205 = vmatpush2.msra.mxu0 0.0
        %1206 = vmatprep.subr.mxu0 0.0
        %1207 = vmatpush2.msra.mxu0 0.0
        %1208 = vmatprep.subr.mxu0 0.0
        %1209 = vmatpush2.msra.mxu0 0.0
        %1210 = vmatprep.subr.mxu0 0.0
        %1211 = vmatpush2.msra.mxu0 0.0
        %1212 = vmatprep.subr.mxu0 0.0
        %1213 = vmatpush2.msra.mxu0 0.0
        %1214 = vmatprep.subr.mxu0 0.0
        %1215 = vmatpush2.msra.mxu0 0.0
        %1216 = vmatprep.mubr.f32.mxu0 0.0
        %1217 = vmatmul.mubr.f32.gmra.mxu0 %v402
        %v1218 = vpop.f32.mrf.mxu0
        %v1219 = vadd.f32 %v1149, %v1218
        %v1220 = vpop.f32.mrf.mxu0
        %1221 = vdwg.mxu0
        %s1222 = scalar_lea.vmem [#allocation2], 40
        %1223 = vst [vmem:[%s1222] sm:$0xff] %v1219
        %v1224 = vmax.f32 %v1074, %v1219
        %s1225 = scalar_lea.vmem %s273, 48 [#allocation3]
        %v1226 = vld [vmem:[%s1225] sm:$0xff]
        %s1227 = scalar_lea.vmem %s317, 12
        %v1228 = vld [vmem:[%s1227] sm:$0x3]
        %v1230 = vsel %vm326, %v1228, 0
        %1232 = vmatprep.subr.mxu0 0.0
        %1233 = vmatpush1.msra.mxu0 0.0
        %1234 = vmatprep.subr.mxu0 0.0
        %1235 = vmatpush1.msra.mxu0 0.0
        %1236 = vmatprep.subr.mxu0 0.0
        %1237 = vmatpush1.msra.mxu0 0.0
        %1238 = vmatprep.subr.mxu0 0.0
        %1239 = vmatpush1.msra.mxu0 0.0
        %1240 = vmatprep.subr.mxu0 0.0
        %1241 = vmatpush1.msra.mxu0 0.0
        %1242 = vmatprep.subr.mxu0 0.0
        %1243 = vmatpush1.msra.mxu0 0.0
        %1244 = vmatprep.subr.mxu0 0.0
        %1245 = vmatpush1.msra.mxu0 0.0
        %1246 = vmatprep.subr.mxu0 0.0
        %1247 = vmatpush1.msra.mxu0 0.0
        %1248 = vmatprep.subr.mxu0 0.0
        %1249 = vmatpush1.msra.mxu0 0.0
        %1250 = vmatprep.subr.mxu0 0.0
        %1251 = vmatpush1.msra.mxu0 0.0
        %1252 = vmatprep.subr.mxu0 0.0
        %1253 = vmatpush1.msra.mxu0 0.0
        %1254 = vmatprep.subr.mxu0 0.0
        %1255 = vmatpush1.msra.mxu0 0.0
        %1256 = vmatprep.subr.mxu0 0.0
        %1257 = vmatpush1.msra.mxu0 0.0
        %1258 = vmatprep.subr.mxu0 0.0
        %1259 = vmatpush1.msra.mxu0 0.0
        %1260 = vmatprep.subr.mxu0 0.0
        %1261 = vmatpush1.msra.mxu0 0.0
        %1262 = vmatprep.subr.mxu0 0.0
        %1263 = vmatpush1.msra.mxu0 %v1230
        %1264 = vmatprep.subr.mxu0 0.0
        %1265 = vmatpush2.msra.mxu0 0.0
        %1266 = vmatprep.subr.mxu0 0.0
        %1267 = vmatpush2.msra.mxu0 0.0
        %1268 = vmatprep.subr.mxu0 0.0
        %1269 = vmatpush2.msra.mxu0 0.0
        %1270 = vmatprep.subr.mxu0 0.0
        %1271 = vmatpush2.msra.mxu0 0.0
        %1272 = vmatprep.subr.mxu0 0.0
        %1273 = vmatpush2.msra.mxu0 0.0
        %1274 = vmatprep.subr.mxu0 0.0
        %1275 = vmatpush2.msra.mxu0 0.0
        %1276 = vmatprep.subr.mxu0 0.0
        %1277 = vmatpush2.msra.mxu0 0.0
        %1278 = vmatprep.subr.mxu0 0.0
        %1279 = vmatpush2.msra.mxu0 0.0
        %1280 = vmatprep.subr.mxu0 0.0
        %1281 = vmatpush2.msra.mxu0 0.0
        %1282 = vmatprep.subr.mxu0 0.0
        %1283 = vmatpush2.msra.mxu0 0.0
        %1284 = vmatprep.subr.mxu0 0.0
        %1285 = vmatpush2.msra.mxu0 0.0
        %1286 = vmatprep.subr.mxu0 0.0
        %1287 = vmatpush2.msra.mxu0 0.0
        %1288 = vmatprep.subr.mxu0 0.0
        %1289 = vmatpush2.msra.mxu0 0.0
        %1290 = vmatprep.subr.mxu0 0.0
        %1291 = vmatpush2.msra.mxu0 0.0
        %1292 = vmatprep.subr.mxu0 0.0
        %1293 = vmatpush2.msra.mxu0 0.0
        %1294 = vmatprep.subr.mxu0 0.0
        %1295 = vmatpush2.msra.mxu0 0.0
        %1296 = vmatprep.mubr.f32.mxu0 0.0
        %1297 = vmatmul.mubr.f32.gmra.mxu0 %v324
        %v1298 = vpop.f32.mrf.mxu0
        %v1299 = vadd.f32 0.0, %v1298
        %v1300 = vpop.f32.mrf.mxu0
        %1301 = vdwg.mxu0
        %1302 = vmatprep.subr.mxu0 0.0
        %1303 = vmatpush1.msra.mxu0 0.0
        %1304 = vmatprep.subr.mxu0 0.0
        %1305 = vmatpush1.msra.mxu0 0.0
        %1306 = vmatprep.subr.mxu0 0.0
        %1307 = vmatpush1.msra.mxu0 0.0
        %1308 = vmatprep.subr.mxu0 0.0
        %1309 = vmatpush1.msra.mxu0 0.0
        %1310 = vmatprep.subr.mxu0 0.0
        %1311 = vmatpush1.msra.mxu0 0.0
        %1312 = vmatprep.subr.mxu0 0.0
        %1313 = vmatpush1.msra.mxu0 0.0
        %1314 = vmatprep.subr.mxu0 0.0
        %1315 = vmatpush1.msra.mxu0 0.0
        %1316 = vmatprep.subr.mxu0 0.0
        %1317 = vmatpush1.msra.mxu0 0.0
        %1318 = vmatprep.subr.mxu0 0.0
        %1319 = vmatpush1.msra.mxu0 0.0
        %1320 = vmatprep.subr.mxu0 0.0
        %1321 = vmatpush1.msra.mxu0 0.0
        %1322 = vmatprep.subr.mxu0 0.0
        %1323 = vmatpush1.msra.mxu0 0.0
        %1324 = vmatprep.subr.mxu0 0.0
        %1325 = vmatpush1.msra.mxu0 0.0
        %1326 = vmatprep.subr.mxu0 0.0
        %1327 = vmatpush1.msra.mxu0 0.0
        %1328 = vmatprep.subr.mxu0 0.0
        %1329 = vmatpush1.msra.mxu0 0.0
        %1330 = vmatprep.subr.mxu0 0.0
        %1331 = vmatpush1.msra.mxu0 0.0
        %1332 = vmatprep.subr.mxu0 0.0
        %1333 = vmatpush1.msra.mxu0 %v1226
        %1334 = vmatprep.subr.mxu0 0.0
        %1335 = vmatpush2.msra.mxu0 0.0
        %1336 = vmatprep.subr.mxu0 0.0
        %1337 = vmatpush2.msra.mxu0 0.0
        %1338 = vmatprep.subr.mxu0 0.0
        %1339 = vmatpush2.msra.mxu0 0.0
        %1340 = vmatprep.subr.mxu0 0.0
        %1341 = vmatpush2.msra.mxu0 0.0
        %1342 = vmatprep.subr.mxu0 0.0
        %1343 = vmatpush2.msra.mxu0 0.0
        %1344 = vmatprep.subr.mxu0 0.0
        %1345 = vmatpush2.msra.mxu0 0.0
        %1346 = vmatprep.subr.mxu0 0.0
        %1347 = vmatpush2.msra.mxu0 0.0
        %1348 = vmatprep.subr.mxu0 0.0
        %1349 = vmatpush2.msra.mxu0 0.0
        %1350 = vmatprep.subr.mxu0 0.0
        %1351 = vmatpush2.msra.mxu0 0.0
        %1352 = vmatprep.subr.mxu0 0.0
        %1353 = vmatpush2.msra.mxu0 0.0
        %1354 = vmatprep.subr.mxu0 0.0
        %1355 = vmatpush2.msra.mxu0 0.0
        %1356 = vmatprep.subr.mxu0 0.0
        %1357 = vmatpush2.msra.mxu0 0.0
        %1358 = vmatprep.subr.mxu0 0.0
        %1359 = vmatpush2.msra.mxu0 0.0
        %1360 = vmatprep.subr.mxu0 0.0
        %1361 = vmatpush2.msra.mxu0 0.0
        %1362 = vmatprep.subr.mxu0 0.0
        %1363 = vmatpush2.msra.mxu0 0.0
        %1364 = vmatprep.subr.mxu0 0.0
        %1365 = vmatpush2.msra.mxu0 0.0
        %1366 = vmatprep.mubr.f32.mxu0 0.0
        %1367 = vmatmul.mubr.f32.gmra.mxu0 %v402
        %v1368 = vpop.f32.mrf.mxu0
        %v1369 = vadd.f32 %v1299, %v1368
        %v1370 = vpop.f32.mrf.mxu0
        %1371 = vdwg.mxu0
        %s1372 = scalar_lea.vmem [#allocation2], 48
        %1373 = vst [vmem:[%s1372] sm:$0xff] %v1369
        %v1374 = vmax.f32 %v1224, %v1369
        %s1375 = scalar_lea.vmem %s273, 56 [#allocation3]
        %v1376 = vld [vmem:[%s1375] sm:$0xff]
        %s1377 = scalar_lea.vmem %s317, 14
        %v1378 = vld [vmem:[%s1377] sm:$0x3]
        %v1380 = vsel %vm326, %v1378, 0
        %1382 = vmatprep.subr.mxu0 0.0
        %1383 = vmatpush1.msra.mxu0 0.0
        %1384 = vmatprep.subr.mxu0 0.0
        %1385 = vmatpush1.msra.mxu0 0.0
        %1386 = vmatprep.subr.mxu0 0.0
        %1387 = vmatpush1.msra.mxu0 0.0
        %1388 = vmatprep.subr.mxu0 0.0
        %1389 = vmatpush1.msra.mxu0 0.0
        %1390 = vmatprep.subr.mxu0 0.0
        %1391 = vmatpush1.msra.mxu0 0.0
        %1392 = vmatprep.subr.mxu0 0.0
        %1393 = vmatpush1.msra.mxu0 0.0
        %1394 = vmatprep.subr.mxu0 0.0
        %1395 = vmatpush1.msra.mxu0 0.0
        %1396 = vmatprep.subr.mxu0 0.0
        %1397 = vmatpush1.msra.mxu0 0.0
        %1398 = vmatprep.subr.mxu0 0.0
        %1399 = vmatpush1.msra.mxu0 0.0
        %1400 = vmatprep.subr.mxu0 0.0
        %1401 = vmatpush1.msra.mxu0 0.0
        %1402 = vmatprep.subr.mxu0 0.0
        %1403 = vmatpush1.msra.mxu0 0.0
        %1404 = vmatprep.subr.mxu0 0.0
        %1405 = vmatpush1.msra.mxu0 0.0
        %1406 = vmatprep.subr.mxu0 0.0
        %1407 = vmatpush1.msra.mxu0 0.0
        %1408 = vmatprep.subr.mxu0 0.0
        %1409 = vmatpush1.msra.mxu0 0.0
        %1410 = vmatprep.subr.mxu0 0.0
        %1411 = vmatpush1.msra.mxu0 0.0
        %1412 = vmatprep.subr.mxu0 0.0
        %1413 = vmatpush1.msra.mxu0 %v1380
        %1414 = vmatprep.subr.mxu0 0.0
        %1415 = vmatpush2.msra.mxu0 0.0
        %1416 = vmatprep.subr.mxu0 0.0
        %1417 = vmatpush2.msra.mxu0 0.0
        %1418 = vmatprep.subr.mxu0 0.0
        %1419 = vmatpush2.msra.mxu0 0.0
        %1420 = vmatprep.subr.mxu0 0.0
        %1421 = vmatpush2.msra.mxu0 0.0
        %1422 = vmatprep.subr.mxu0 0.0
        %1423 = vmatpush2.msra.mxu0 0.0
        %1424 = vmatprep.subr.mxu0 0.0
        %1425 = vmatpush2.msra.mxu0 0.0
        %1426 = vmatprep.subr.mxu0 0.0
        %1427 = vmatpush2.msra.mxu0 0.0
        %1428 = vmatprep.subr.mxu0 0.0
        %1429 = vmatpush2.msra.mxu0 0.0
        %1430 = vmatprep.subr.mxu0 0.0
        %1431 = vmatpush2.msra.mxu0 0.0
        %1432 = vmatprep.subr.mxu0 0.0
        %1433 = vmatpush2.msra.mxu0 0.0
        %1434 = vmatprep.subr.mxu0 0.0
        %1435 = vmatpush2.msra.mxu0 0.0
        %1436 = vmatprep.subr.mxu0 0.0
        %1437 = vmatpush2.msra.mxu0 0.0
        %1438 = vmatprep.subr.mxu0 0.0
        %1439 = vmatpush2.msra.mxu0 0.0
        %1440 = vmatprep.subr.mxu0 0.0
        %1441 = vmatpush2.msra.mxu0 0.0
        %1442 = vmatprep.subr.mxu0 0.0
        %1443 = vmatpush2.msra.mxu0 0.0
        %1444 = vmatprep.subr.mxu0 0.0
        %1445 = vmatpush2.msra.mxu0 0.0
        %1446 = vmatprep.mubr.f32.mxu0 0.0
        %1447 = vmatmul.mubr.f32.gmra.mxu0 %v324
        %v1448 = vpop.f32.mrf.mxu0
        %v1449 = vadd.f32 0.0, %v1448
        %v1450 = vpop.f32.mrf.mxu0
        %1451 = vdwg.mxu0
        %1452 = vmatprep.subr.mxu0 0.0
        %1453 = vmatpush1.msra.mxu0 0.0
        %1454 = vmatprep.subr.mxu0 0.0
        %1455 = vmatpush1.msra.mxu0 0.0
        %1456 = vmatprep.subr.mxu0 0.0
        %1457 = vmatpush1.msra.mxu0 0.0
        %1458 = vmatprep.subr.mxu0 0.0
        %1459 = vmatpush1.msra.mxu0 0.0
        %1460 = vmatprep.subr.mxu0 0.0
        %1461 = vmatpush1.msra.mxu0 0.0
        %1462 = vmatprep.subr.mxu0 0.0
        %1463 = vmatpush1.msra.mxu0 0.0
        %1464 = vmatprep.subr.mxu0 0.0
        %1465 = vmatpush1.msra.mxu0 0.0
        %1466 = vmatprep.subr.mxu0 0.0
        %1467 = vmatpush1.msra.mxu0 0.0
        %1468 = vmatprep.subr.mxu0 0.0
        %1469 = vmatpush1.msra.mxu0 0.0
        %1470 = vmatprep.subr.mxu0 0.0
        %1471 = vmatpush1.msra.mxu0 0.0
        %1472 = vmatprep.subr.mxu0 0.0
        %1473 = vmatpush1.msra.mxu0 0.0
        %1474 = vmatprep.subr.mxu0 0.0
        %1475 = vmatpush1.msra.mxu0 0.0
        %1476 = vmatprep.subr.mxu0 0.0
        %1477 = vmatpush1.msra.mxu0 0.0
        %1478 = vmatprep.subr.mxu0 0.0
        %1479 = vmatpush1.msra.mxu0 0.0
        %1480 = vmatprep.subr.mxu0 0.0
        %1481 = vmatpush1.msra.mxu0 0.0
        %1482 = vmatprep.subr.mxu0 0.0
        %1483 = vmatpush1.msra.mxu0 %v1376
        %1484 = vmatprep.subr.mxu0 0.0
        %1485 = vmatpush2.msra.mxu0 0.0
        %1486 = vmatprep.subr.mxu0 0.0
        %1487 = vmatpush2.msra.mxu0 0.0
        %1488 = vmatprep.subr.mxu0 0.0
        %1489 = vmatpush2.msra.mxu0 0.0
        %1490 = vmatprep.subr.mxu0 0.0
        %1491 = vmatpush2.msra.mxu0 0.0
        %1492 = vmatprep.subr.mxu0 0.0
        %1493 = vmatpush2.msra.mxu0 0.0
        %1494 = vmatprep.subr.mxu0 0.0
        %1495 = vmatpush2.msra.mxu0 0.0
        %1496 = vmatprep.subr.mxu0 0.0
        %1497 = vmatpush2.msra.mxu0 0.0
        %1498 = vmatprep.subr.mxu0 0.0
        %1499 = vmatpush2.msra.mxu0 0.0
        %1500 = vmatprep.subr.mxu0 0.0
        %1501 = vmatpush2.msra.mxu0 0.0
        %1502 = vmatprep.subr.mxu0 0.0
        %1503 = vmatpush2.msra.mxu0 0.0
        %1504 = vmatprep.subr.mxu0 0.0
        %1505 = vmatpush2.msra.mxu0 0.0
        %1506 = vmatprep.subr.mxu0 0.0
        %1507 = vmatpush2.msra.mxu0 0.0
        %1508 = vmatprep.subr.mxu0 0.0
        %1509 = vmatpush2.msra.mxu0 0.0
        %1510 = vmatprep.subr.mxu0 0.0
        %1511 = vmatpush2.msra.mxu0 0.0
        %1512 = vmatprep.subr.mxu0 0.0
        %1513 = vmatpush2.msra.mxu0 0.0
        %1514 = vmatprep.subr.mxu0 0.0
        %1515 = vmatpush2.msra.mxu0 0.0
        %1516 = vmatprep.mubr.f32.mxu0 0.0
        %1517 = vmatmul.mubr.f32.gmra.mxu0 %v402
        %v1518 = vpop.f32.mrf.mxu0
        %v1519 = vadd.f32 %v1449, %v1518
        %v1520 = vpop.f32.mrf.mxu0
        %1521 = vdwg.mxu0
        %s1522 = scalar_lea.vmem [#allocation2], 56
        %1523 = vst [vmem:[%s1522] sm:$0xff] %v1519
        %v1524 = vmax.f32 %v1374, %v1519
        %v1525 = vld [vmem:[#allocation2] sm:$0xff]
        %v1526 = vsub.f32 %v1525, %v1524
        %v1527 = vmul.f32 %v1526, 1.442695
        %v1528 = vpow.pop %v1527
        %v1529 = vadd.f32 %v1528, 0.0
        %v1530 = vld [vmem:[%s273] sm:$0xff]
        %v1531 = vmul.f32 %v1530, %v1528
        %v1532 = vadd.f32 %v1531, 0.0
        %v1533 = vld [vmem:[%s622] sm:$0xff]
        %v1534 = vsub.f32 %v1533, %v1524
        %v1535 = vmul.f32 %v1534, 1.442695
        %v1536 = vpow.pop %v1535
        %v1537 = vadd.f32 %v1529, %v1536
        %v1538 = vld [vmem:[%s475] sm:$0xff]
        %v1539 = vmul.f32 %v1538, %v1536
        %v1540 = vadd.f32 %v1532, %v1539
        %v1541 = vld [vmem:[%s772] sm:$0xff]
        %v1542 = vsub.f32 %v1541, %v1524
        %v1543 = vmul.f32 %v1542, 1.442695
        %v1544 = vpow.pop %v1543
        %v1545 = vadd.f32 %v1537, %v1544
        %v1546 = vld [vmem:[%s625] sm:$0xff]
        %v1547 = vmul.f32 %v1546, %v1544
        %v1548 = vadd.f32 %v1540, %v1547
        %v1549 = vld [vmem:[%s922] sm:$0xff]
        %v1550 = vsub.f32 %v1549, %v1524
        %v1551 = vmul.f32 %v1550, 1.442695
        %v1552 = vpow.pop %v1551
        %v1553 = vadd.f32 %v1545, %v1552
        %v1554 = vld [vmem:[%s775] sm:$0xff]
        %v1555 = vmul.f32 %v1554, %v1552
        %v1556 = vadd.f32 %v1548, %v1555
        %v1557 = vld [vmem:[%s1072] sm:$0xff]
        %v1558 = vsub.f32 %v1557, %v1524
        %v1559 = vmul.f32 %v1558, 1.442695
        %v1560 = vpow.pop %v1559
        %v1561 = vadd.f32 %v1553, %v1560
        %v1562 = vld [vmem:[%s925] sm:$0xff]
        %v1563 = vmul.f32 %v1562, %v1560
        %v1564 = vadd.f32 %v1556, %v1563
        %v1565 = vld [vmem:[%s1222] sm:$0xff]
        %v1566 = vsub.f32 %v1565, %v1524
        %v1567 = vmul.f32 %v1566, 1.442695
        %v1568 = vpow.pop %v1567
        %v1569 = vadd.f32 %v1561, %v1568
        %v1570 = vld [vmem:[%s1075] sm:$0xff]
        %v1571 = vmul.f32 %v1570, %v1568
        %v1572 = vadd.f32 %v1564, %v1571
        %v1573 = vld [vmem:[%s1372] sm:$0xff]
        %v1574 = vsub.f32 %v1573, %v1524
        %v1575 = vmul.f32 %v1574, 1.442695
        %v1576 = vpow.pop %v1575
        %v1577 = vadd.f32 %v1569, %v1576
        %v1578 = vld [vmem:[%s1225] sm:$0xff]
        %v1579 = vmul.f32 %v1578, %v1576
        %v1580 = vadd.f32 %v1572, %v1579
        %v1581 = vld [vmem:[%s1522] sm:$0xff]
        %v1582 = vsub.f32 %v1581, %v1524
        %v1583 = vmul.f32 %v1582, 1.442695
        %v1584 = vpow.pop %v1583
        %v1585 = vadd.f32 %v1577, %v1584
        %v1586 = vld [vmem:[%s1375] sm:$0xff]
        %v1587 = vmul.f32 %v1586, %v1584
        %v1588 = vadd.f32 %v1580, %v1587
        %v1589 = vrcp.pop %v1585
        %v1590 = vmul.f32 %v1588, %v1589
        %v1591 = vld [vmem:[%s4] sm:$0xff]
        %v1592 = vld [vmem:[%s4 + $0x8] sm:$0xff]
        %v1593 = vld [vmem:[%s5] sm:$0xff]
        %v1594 = vld [vmem:[%s5 + $0x8] sm:$0xff]
        %1596 = vset.pattern.permute.xlu0 0
        %1597 = vperm.xlu0 %1596, %v1593
        %v1598 = vpop.permute.xlu0 %1597
        %1601 = vset.pattern.permute.xlu0 0
        %1602 = vperm.xlu0 %1601, %v1594
        %v1603 = vpop.permute.xlu0 %1602
        %v1606 = vsel %vm400, %v1591, 0
        %v1609 = vsel %vm400, %v1592, 0
        %1611 = vmatprep.subr.mxu0 0.0
        %1612 = vmatpush1.msra.mxu0 0.0
        %1613 = vmatprep.subr.mxu0 0.0
        %1614 = vmatpush1.msra.mxu0 0.0
        %1615 = vmatprep.subr.mxu0 0.0
        %1616 = vmatpush1.msra.mxu0 0.0
        %1617 = vmatprep.subr.mxu0 0.0
        %1618 = vmatpush1.msra.mxu0 0.0
        %1619 = vmatprep.subr.mxu0 0.0
        %1620 = vmatpush1.msra.mxu0 0.0
        %1621 = vmatprep.subr.mxu0 0.0
        %1622 = vmatpush1.msra.mxu0 0.0
        %1623 = vmatprep.subr.mxu0 0.0
        %1624 = vmatpush1.msra.mxu0 0.0
        %1625 = vmatprep.subr.mxu0 0.0
        %1626 = vmatpush1.msra.mxu0 0.0
        %1627 = vmatprep.subr.mxu0 0.0
        %1628 = vmatpush1.msra.mxu0 0.0
        %1629 = vmatprep.subr.mxu0 0.0
        %1630 = vmatpush1.msra.mxu0 0.0
        %1631 = vmatprep.subr.mxu0 0.0
        %1632 = vmatpush1.msra.mxu0 0.0
        %1633 = vmatprep.subr.mxu0 0.0
        %1634 = vmatpush1.msra.mxu0 0.0
        %1635 = vmatprep.subr.mxu0 0.0
        %1636 = vmatpush1.msra.mxu0 0.0
        %1637 = vmatprep.subr.mxu0 0.0
        %1638 = vmatpush1.msra.mxu0 0.0
        %1639 = vmatprep.subr.mxu0 0.0
        %1640 = vmatpush1.msra.mxu0 0.0
        %1641 = vmatprep.subr.mxu0 0.0
        %1642 = vmatpush1.msra.mxu0 %v1590
        %1643 = vmatprep.subr.mxu0 0.0
        %1644 = vmatpush2.msra.mxu0 0.0
        %1645 = vmatprep.subr.mxu0 0.0
        %1646 = vmatpush2.msra.mxu0 0.0
        %1647 = vmatprep.subr.mxu0 0.0
        %1648 = vmatpush2.msra.mxu0 0.0
        %1649 = vmatprep.subr.mxu0 0.0
        %1650 = vmatpush2.msra.mxu0 0.0
        %1651 = vmatprep.subr.mxu0 0.0
        %1652 = vmatpush2.msra.mxu0 0.0
        %1653 = vmatprep.subr.mxu0 0.0
        %1654 = vmatpush2.msra.mxu0 0.0
        %1655 = vmatprep.subr.mxu0 0.0
        %1656 = vmatpush2.msra.mxu0 0.0
        %1657 = vmatprep.subr.mxu0 0.0
        %1658 = vmatpush2.msra.mxu0 0.0
        %1659 = vmatprep.subr.mxu0 0.0
        %1660 = vmatpush2.msra.mxu0 0.0
        %1661 = vmatprep.subr.mxu0 0.0
        %1662 = vmatpush2.msra.mxu0 0.0
        %1663 = vmatprep.subr.mxu0 0.0
        %1664 = vmatpush2.msra.mxu0 0.0
        %1665 = vmatprep.subr.mxu0 0.0
        %1666 = vmatpush2.msra.mxu0 0.0
        %1667 = vmatprep.subr.mxu0 0.0
        %1668 = vmatpush2.msra.mxu0 0.0
        %1669 = vmatprep.subr.mxu0 0.0
        %1670 = vmatpush2.msra.mxu0 0.0
        %1671 = vmatprep.subr.mxu0 0.0
        %1672 = vmatpush2.msra.mxu0 0.0
        %1673 = vmatprep.subr.mxu0 0.0
        %1674 = vmatpush2.msra.mxu0 0.0
        %1675 = vmatprep.mubr.f32.mxu0 0.0
        %1676 = vmatmul.mubr.f32.gmra.mxu0 %v1606
        %v1677 = vpop.f32.mrf.mxu0
        %v1678 = vadd.f32 %v1598, %v1677
        %v1679 = vpop.f32.mrf.mxu0
        %1680 = vmatprep.mubr.f32.mxu0 0.0
        %1681 = vmatmul.mubr.f32.gmra.mxu0 %v1609
        %v1682 = vpop.f32.mrf.mxu0
        %v1683 = vadd.f32 %v1603, %v1682
        %v1684 = vpop.f32.mrf.mxu0
        %1685 = vdwg.mxu0
        %v1686 = vmax.f32 %v1678, 0.0
        %v1687 = vmax.f32 %v1683, 0.0
        %1688 = vst [vmem:[%s309] sm:$0xff] %v1686
        %1689 = vst [vmem:[%s309 + $0x8] sm:$0xff] %v1687
        %s1690 = sand.u32 %s185, 1
        %s1691 = scalar_lea.sflag [#allocation5], %s1690
        %s1692 = sand.u32 %s185, 1
        %s1693 = smul.addr %s1692, 16
        %s1694 = scalar_lea.vmem [#allocation6], %s1693
        // Predicated region
        $region49: #{tpu_custom_call.1} parent=43 // pred_check
          %p1695 = pneg %p195
        $region50: #{tpu_custom_call.1} parent=43 // pred_check_branch
          %1697 = sbr.rel (%p1695) target = $region52
        $region51: #{tpu_custom_call.1} parent=43 // pred_region
          %s1699 = ssub.s32 256, 256
          %1700 = vsyncadd %s1691, %s1699
          %s1701 = smul.addr %s27, 2
          %s1702 = sadd.s32 %s28, %s1701
          %s1703 = smul.addr %s1702, 128
          %s1704 = scalar_lea.hbm %s6, %s1703
          %s1705 = sshll.u32 %s1694, 4
          %s1706 = int_to_ptr.vmem [resolvable:$true] %s1705
          %1711 = dma.vmem_to_hbm [thread:$0]  %s1706, 256, %s1704, %s1691, 128, 128, 8
        $region52: #{tpu_custom_call.1} parent=43 // pred_fallthru
          _
      $region44: #{tpu_custom_call.1} parent=5 // pred_fallthru
        _
      %p1712 = scmp.le.s32.totalorder 2, %s18
      // Predicated region
      $region53: #{tpu_custom_call.1} parent=5 // pred_check
        %p1713 = pneg %p1712
      $region54: #{tpu_custom_call.1} parent=5 // pred_check_branch
        %1715 = sbr.rel (%p1713) target = $region56
      $region55: #{tpu_custom_call.1} parent=5 // pred_region
        %s1716 = ssub.s32 %s18, 2
        // Predicated region
        $region57: #{tpu_custom_call.1} parent=55 // pred_check
          %p1717 = pneg %p201
        $region58: #{tpu_custom_call.1} parent=55 // pred_check_branch
          %1719 = sbr.rel (%p1717) target = $region60
        $region59: #{tpu_custom_call.1} parent=55 // pred_region
          %s1720 = sand.u32 %s186, 1
          %s1721 = scalar_lea.sflag [#allocation5], %s1720
          %s1722 = sand.u32 %s186, 1
          %s1723 = smul.addr %s1722, 16
          %s1724 = scalar_lea.vmem [#allocation6], %s1723
          %1725 = dma.done %s1721, 256
        $region60: #{tpu_custom_call.1} parent=55 // pred_fallthru
          _
      $region56: #{tpu_custom_call.1} parent=5 // pred_fallthru
        _
    $region6: #{tpu_custom_call.1} parent=1 // loop_footer
      %s22 = sadd.s32 1, %s18
    $region7: #{tpu_custom_call.1} parent=1 // loop_footer_branch
      %17 = sbr.rel target = $region3
    $region8: #{tpu_custom_call.1} parent=1 // loop_exit
      _
    %1726 = vsyncpa [#allocation4], 1
    %s1727 = scalar_lea.sflag [#allocation4], 1
    %1728 = vsyncpa %s1727, 1
    %1729 = vsyncpa [#allocation5], 1
    %s1730 = scalar_lea.sflag [#allocation5], 1
    %1731 = vsyncpa %s1730, 1

</llo_original>
